<compile_context>
chip_gen: v6e
topology: v6e:2x2x1
jax: 0.10.0
libtpu: 0.0.40
codegen_flags: <defaults>
</compile_context>

<pallas_src>
import math
import functools

import jax
import jax.numpy as jnp
from jax.experimental import pallas as pl
from jax.experimental.pallas import tpu as pltpu

_F32 = jnp.float32
_BF16 = jnp.bfloat16


def _layernorm(v, g, b, eps=1e-5):
    # centered two-pass statistics (avoids E[x^2]-E[x]^2 cancellation)
    mu = jnp.mean(v, axis=-1, keepdims=True)
    xc = v - mu
    var = jnp.mean(xc * xc, axis=-1, keepdims=True)
    return xc * jax.lax.rsqrt(var + eps) * g + b


# --------------------------------------------------------------------------
# Kernel 1: LayerNorm1 + QKV projections (once per row tile, not per q-tile)
# --------------------------------------------------------------------------
def ln1_qkv_kernel(x_ref, g_ref, b_ref,
                   wq_ref, bq_ref, wk_ref, bk_ref, wv_ref, bv_ref,
                   q_ref, k_ref, v_ref, *, n_heads, sm_scale):
    tr, D = x_ref.shape[1], x_ref.shape[2]
    hd = D // n_heads

    h = _layernorm(x_ref[0].astype(_F32), g_ref[...], b_ref[...]).astype(_BF16)

    # Q: fold 1/sqrt(hd) in here (tq*D multiplies instead of H*tq*S per step)
    q = ((jnp.dot(h, wq_ref[...], preferred_element_type=_F32) + bq_ref[...])
         * sm_scale).astype(_BF16)
    q_ref[0] = pltpu.einshape("shd->hsd", q.reshape(tr, n_heads, hd))

    # K in (H, hd, S) layout -> the QK matmul downstream is a plain NN matmul.
    # bf16 cast chained immediately so the f32 temporary dies.
    k = (jnp.dot(h, wk_ref[...], preferred_element_type=_F32)
         + bk_ref[...]).astype(_BF16)
    k_ref[0] = pltpu.einshape("shd->hds", k.reshape(tr, n_heads, hd))

    v = (jnp.dot(h, wv_ref[...], preferred_element_type=_F32)
         + bv_ref[...]).astype(_BF16)
    v_ref[0] = pltpu.einshape("shd->hsd", v.reshape(tr, n_heads, hd))


# --------------------------------------------------------------------------
# Kernel 2: flash-tiled attention + proj + residual + LN2 + MLP per q-tile
# --------------------------------------------------------------------------
def attn_mlp_kernel(x_ref, q_ref, k_ref, v_ref,
                    wproj_ref, bproj_ref,
                    ln2g_ref, ln2b_ref,
                    wfc1_ref, bfc1_ref, wfc2_ref, bfc2_ref,
                    out_ref, *, n_heads, kv_tile):
    tq = x_ref.shape[1]
    D = x_ref.shape[2]
    H = n_heads
    hd = D // H
    S = v_ref.shape[2]
    tkv = kv_tile
    n_kv = S // tkv

    qh = q_ref[0]                                    # (H, tq, hd) bf16, pre-scaled

    if n_kv == 1:
        # whole KV fits in one tile -> single numerically-stable softmax pass
        s = jnp.einsum("hqd,hds->hqs", qh, k_ref[0],
                       preferred_element_type=_F32)
        s = s - jnp.max(s, axis=-1, keepdims=True)
        p = jnp.exp(s)
        acc = jnp.einsum("hqk,hkd->hqd", p.astype(_BF16), v_ref[0],
                         preferred_element_type=_F32)
        l = jnp.sum(p, axis=-1, keepdims=True)
    else:
        # flash-style online softmax: live score block is (H, tq, tkv), never
        # the full (H, tq, S) f32 tensor.
        def kv_step(i, carry):
            m, l, acc = carry
            off = pl.multiple_of(i * tkv, tkv)
            kt = k_ref[0, :, :, pl.ds(off, tkv)]      # (H, hd, tkv) bf16
            vt = v_ref[0, :, pl.ds(off, tkv), :]      # (H, tkv, hd) bf16
            s = jnp.einsum("hqd,hds->hqs", qh, kt,
                           preferred_element_type=_F32)
            m_new = jnp.maximum(m, jnp.max(s, axis=-1, keepdims=True))
            alpha = jnp.exp(m - m_new)
            p = jnp.exp(s - m_new)
            l_new = alpha * l + jnp.sum(p, axis=-1, keepdims=True)
            acc_new = alpha * acc + jnp.einsum(
                "hqk,hkd->hqd", p.astype(_BF16), vt,
                preferred_element_type=_F32)
            return m_new, l_new, acc_new

        m0 = jnp.full((H, tq, 1), -jnp.inf, _F32)
        l0 = jnp.zeros((H, tq, 1), _F32)
        acc0 = jnp.zeros((H, tq, hd), _F32)
        _, l, acc = jax.lax.fori_loop(0, n_kv, kv_step, (m0, l0, acc0))

    y = acc * pl.reciprocal(l, approx=True)           # EUP slot, ~free
    y = pltpu.einshape("hqd->qhd", y.astype(_BF16)).reshape(tq, D)

    x_res = x_ref[0].astype(_F32)                      # (tq, D) residual stream
    attn_out = (jnp.dot(y, wproj_ref[...], preferred_element_type=_F32)
                + bproj_ref[...])
    x1 = x_res + attn_out                              # residual 1

    h2 = _layernorm(x1, ln2g_ref[...], ln2b_ref[...]).astype(_BF16)
    ff = jnp.dot(h2, wfc1_ref[...], preferred_element_type=_F32) + bfc1_ref[...]
    ff = jax.nn.gelu(ff, approximate=True).astype(_BF16)
    ff = jnp.dot(ff, wfc2_ref[...], preferred_element_type=_F32) + bfc2_ref[...]
    out_ref[0] = (x1 + ff).astype(out_ref.dtype)       # residual 2


# --------------------------------------------------------------------------
# Wrapper
# --------------------------------------------------------------------------
def _pick_tile(S, preferred):
    for t in preferred:
        if t <= S and S % t == 0:
            return t
    return S


def _clamp_vmem(request_bytes):
    try:
        cap = int(pltpu.get_tpu_info().vmem_capacity_bytes)
    except Exception:
        cap = 64 << 20          # be conservative (v7x physical VMEM)
    return int(min(max(request_bytes, 32 << 20), int(cap * 0.85)))


def transformer_block(x, params, *, n_heads, q_tile=256, kv_tile=512):
    B, S, D = x.shape
    hidden = params["w_fc1"].shape[1]
    assert D % n_heads == 0
    hd = D // n_heads

    # tq=256 fills the 256-wide MXU on v6e/v7x (pass q_tile=128 on v5e);
    # tkv bounds the live (H, tq, tkv) score block.
    tq = _pick_tile(S, (q_tile, 256, 128))
    tkv = _pick_tile(S, (kv_tile, 512, 256, 128))
    n_qt = S // tq          # keep B * n_qt >= 2 so both v7x cores get work

    # bf16 MXU operands (f32 accumulation via preferred_element_type)
    w_qkv, b_qkv = params["w_qkv"], params["b_qkv"]
    w_q, w_k, w_v = (w_qkv[:, i * D:(i + 1) * D].astype(_BF16) for i in range(3))
    b_q, b_k, b_v = (b_qkv[:, i * D:(i + 1) * D] for i in range(3))
    w_proj = params["w_proj"].astype(_BF16)
    w_fc1 = params["w_fc1"].astype(_BF16)
    w_fc2 = params["w_fc2"].astype(_BF16)

    def const_spec(shape):
        # weight / bias blocks: index never changes -> single-buffer them
        return pl.BlockSpec(shape, lambda b, i: (0, 0),
                            pipeline_mode=pl.Buffered(1))

    # ---------------- call 1: LN1 + QKV projections -------------------------
    vmem_req1 = (3 * D * D * 2                 # bf16 weights, single-buffered
                 + 2 * tq * D * 4              # x tile, 2 bufs
                 + 3 * 2 * tq * D * 2          # q/k/v output tiles, 2 bufs each
                 + 6 * tq * D * 4              # f32/bf16 intermediates
                 + (8 << 20))                  # headroom
    qkv_call = pl.pallas_call(
        functools.partial(ln1_qkv_kernel, n_heads=n_heads,
                          sm_scale=1.0 / math.sqrt(hd)),
        out_shape=(jax.ShapeDtypeStruct((B, n_heads, S, hd), _BF16),   # Q head-major
                   jax.ShapeDtypeStruct((B, n_heads, hd, S), _BF16),   # K (H,hd,S)
                   jax.ShapeDtypeStruct((B, n_heads, S, hd), _BF16)),  # V head-major
        grid_spec=pltpu.PrefetchScalarGridSpec(
            num_scalar_prefetch=0,
            grid=(B, n_qt),
            in_specs=[
                pl.BlockSpec((1, tq, D), lambda b, i: (b, i, 0)),      # x row tile
                const_spec((1, D)), const_spec((1, D)),                # ln1 g/b
                const_spec((D, D)), const_spec((1, D)),                # w_q, b_q
                const_spec((D, D)), const_spec((1, D)),                # w_k, b_k
                const_spec((D, D)), const_spec((1, D)),                # w_v, b_v
            ],
            out_specs=[
                pl.BlockSpec((1, n_heads, tq, hd), lambda b, i: (b, 0, i, 0)),
                pl.BlockSpec((1, n_heads, hd, tq), lambda b, i: (b, 0, 0, i)),
                pl.BlockSpec((1, n_heads, tq, hd), lambda b, i: (b, 0, i, 0)),
            ]),
        compiler_params=pltpu.CompilerParams(
            dimension_semantics=("parallel", "parallel"),
            vmem_limit_bytes=_clamp_vmem(vmem_req1)),
        cost_estimate=pl.CostEstimate(
            flops=6 * B * S * D * D,
            transcendentals=B * S,                       # rsqrt per row
            bytes_accessed=int(B * S * D * (4 + 3 * 2) + 3 * D * D * 2)),
    )
    q_hm, k_hm, v_hm = qkv_call(x, params["ln1_g"], params["ln1_b"],
                                w_q, b_q, w_k, b_k, w_v, b_v)

    # ---------------- call 2: attention + residual + MLP --------------------
    vmem_req2 = (2 * (D * D + 2 * D * hidden)   # bf16 weights, single-buffered
                 + 4 * tq * D * 4               # x tile + out tile, 2 bufs each
                 + 2 * tq * D * 2               # q tile, 2 bufs
                 + 2 * 2 * S * D * 2            # K + V full sequence, 2 bufs each
                 + 2 * n_heads * tq * tkv * 4   # live score + exp block
                 + n_heads * tq * (hd + 2) * 4  # online-softmax acc / m / l
                 + 2 * tq * hidden * 4          # MLP intermediates
                 + (8 << 20))                   # headroom
    flops2 = 4 * B * S * S * D + 2 * B * S * D * D + 4 * B * S * D * hidden
    block_call = pl.pallas_call(
        functools.partial(attn_mlp_kernel, n_heads=n_heads, kv_tile=tkv),
        out_shape=jax.ShapeDtypeStruct((B, S, D), x.dtype),
        grid_spec=pltpu.PrefetchScalarGridSpec(
            num_scalar_prefetch=0,
            grid=(B, n_qt),
            in_specs=[
                pl.BlockSpec((1, tq, D), lambda b, i: (b, i, 0)),              # x tile
                pl.BlockSpec((1, n_heads, tq, hd), lambda b, i: (b, 0, i, 0)),  # Q tile
                pl.BlockSpec((1, n_heads, hd, S), lambda b, i: (b, 0, 0, 0)),   # K (per batch)
                pl.BlockSpec((1, n_heads, S, hd), lambda b, i: (b, 0, 0, 0)),   # V (per batch)
                const_spec((D, D)), const_spec((1, D)),                         # proj
                const_spec((1, D)), const_spec((1, D)),                         # ln2 g/b
                const_spec((D, hidden)), const_spec((1, hidden)),               # fc1
                const_spec((hidden, D)), const_spec((1, D)),                    # fc2
            ],
            out_specs=pl.BlockSpec((1, tq, D), lambda b, i: (b, i, 0))),
        compiler_params=pltpu.CompilerParams(
            dimension_semantics=("parallel", "parallel"),
            vmem_limit_bytes=_clamp_vmem(vmem_req2)),
        cost_estimate=pl.CostEstimate(
            flops=flops2,
            transcendentals=B * n_heads * S * S + B * S * hidden,
            bytes_accessed=int(2 * B * S * D * 4 + 3 * B * S * D * 2
                               + 2 * (D * D + 2 * D * hidden))),
    )
    return block_call(x, q_hm, k_hm, v_hm,
                      w_proj, params["b_proj"],
                      params["ln2_g"], params["ln2_b"],
                      w_fc1, params["b_fc1"],
                      w_fc2, params["b_fc2"])


# --------------------------------------------------------------------------
# Params / reference / demo
# --------------------------------------------------------------------------
def init_params(key, dim, hidden):
    ks = jax.random.split(key, 8)
    scale = 0.02
    return {
        "ln1_g": jnp.ones((1, dim), jnp.float32),
        "ln1_b": jnp.zeros((1, dim), jnp.float32),
        "ln2_g": jnp.ones((1, dim), jnp.float32),
        "ln2_b": jnp.zeros((1, dim), jnp.float32),
        # Linear weights stored as (in, out) == PyTorch W.T
        "w_qkv": scale * jax.random.normal(ks[0], (dim, 3 * dim), jnp.float32),
        "b_qkv": scale * jax.random.normal(ks[1], (1, 3 * dim), jnp.float32),
        "w_proj": scale * jax.random.normal(ks[2], (dim, dim), jnp.float32),
        "b_proj": scale * jax.random.normal(ks[3], (1, dim), jnp.float32),
        "w_fc1": scale * jax.random.normal(ks[4], (dim, hidden), jnp.float32),
        "b_fc1": scale * jax.random.normal(ks[5], (1, hidden), jnp.float32),
        "w_fc2": scale * jax.random.normal(ks[6], (hidden, dim), jnp.float32),
        "b_fc2": scale * jax.random.normal(ks[7], (1, dim), jnp.float32),
    }


def block_reference(x, params, n_heads):
    """Pure-JAX f32 reference matching the PyTorch forward (eval mode)."""
    def ln(v, g, b, eps=1e-5):
        mu = v.mean(-1, keepdims=True)
        var = ((v - mu) ** 2).mean(-1, keepdims=True)
        return (v - mu) / jnp.sqrt(var + eps) * g + b

    B, S, D = x.shape
    hd = D // n_heads
    h = ln(x, params["ln1_g"], params["ln1_b"])
    qkv = h @ params["w_qkv"] + params["b_qkv"]
    q, k, v = jnp.split(qkv, 3, axis=-1)
    q = q.reshape(B, S, n_heads, hd).transpose(0, 2, 1, 3)
    k = k.reshape(B, S, n_heads, hd).transpose(0, 2, 1, 3)
    v = v.reshape(B, S, n_heads, hd).transpose(0, 2, 1, 3)
    att = (q @ k.transpose(0, 1, 3, 2)) * (1.0 / math.sqrt(hd))
    att = jax.nn.softmax(att, axis=-1)
    y = (att @ v).transpose(0, 2, 1, 3).reshape(B, S, D)
    y = y @ params["w_proj"] + params["b_proj"]
    x1 = x + y
    h2 = ln(x1, params["ln2_g"], params["ln2_b"])
    ff = h2 @ params["w_fc1"] + params["b_fc1"]
    ff = jax.nn.gelu(ff, approximate=True)
    ff = ff @ params["w_fc2"] + params["b_fc2"]
    return x1 + ff


if __name__ == "__main__":
    B, S, DIM, N_HEADS = 2, 8, 32, 4
    HIDDEN = 4 * DIM

    key = jax.random.PRNGKey(0)
    kx, kp = jax.random.split(key)
    x = jax.random.normal(kx, (B, S, DIM), jnp.float32)
    params = init_params(kp, DIM, HIDDEN)

    out = transformer_block(x, params, n_heads=N_HEADS)
    out = jax.block_until_ready(out)
    assert out.shape == (B, S, DIM)

    ref = block_reference(x, params, N_HEADS)
    max_err = float(jnp.max(jnp.abs(out - ref)))
    assert max_err < 5e-2, f"max |kernel - reference| = {max_err}"
    print("KERNEL_OK")
</pallas_src>

<mosaic_0001>
module attributes {stable_mosaic.version = 11 : i64} {
  func.func @ln1_qkv_kernel(%arg0: i32, %arg1: i32, %arg2: memref<1x8x32xf32, #tpu.memory_space<vmem>>, %arg3: memref<1x32xf32, #tpu.memory_space<vmem>>, %arg4: memref<1x32xf32, #tpu.memory_space<vmem>>, %arg5: memref<32x32xbf16, #tpu.memory_space<vmem>>, %arg6: memref<1x32xf32, #tpu.memory_space<vmem>>, %arg7: memref<32x32xbf16, #tpu.memory_space<vmem>>, %arg8: memref<1x32xf32, #tpu.memory_space<vmem>>, %arg9: memref<32x32xbf16, #tpu.memory_space<vmem>>, %arg10: memref<1x32xf32, #tpu.memory_space<vmem>>, %arg11: memref<1x4x8x8xbf16, #tpu.memory_space<vmem>>, %arg12: memref<1x4x8x8xbf16, #tpu.memory_space<vmem>>, %arg13: memref<1x4x8x8xbf16, #tpu.memory_space<vmem>>) attributes {dimension_semantics = [#tpu.dimension_semantics<parallel>, #tpu.dimension_semantics<parallel>], iteration_bounds = array<i64: 2, 1>, scalar_prefetch = 0 : i64, scratch_operands = 0 : i64, tpu.core_type = #tpu.core_type<tc>, window_params = [{transform_indices = @transform_0, window_bounds = array<i64: 1, 8, 32>}, {pipeline_mode = #tpu.pipeline_mode<synchronous>, transform_indices = @transform_1, window_bounds = array<i64: 1, 32>}, {pipeline_mode = #tpu.pipeline_mode<synchronous>, transform_indices = @transform_2, window_bounds = array<i64: 1, 32>}, {pipeline_mode = #tpu.pipeline_mode<synchronous>, transform_indices = @transform_3, window_bounds = array<i64: 32, 32>}, {pipeline_mode = #tpu.pipeline_mode<synchronous>, transform_indices = @transform_4, window_bounds = array<i64: 1, 32>}, {pipeline_mode = #tpu.pipeline_mode<synchronous>, transform_indices = @transform_5, window_bounds = array<i64: 32, 32>}, {pipeline_mode = #tpu.pipeline_mode<synchronous>, transform_indices = @transform_6, window_bounds = array<i64: 1, 32>}, {pipeline_mode = #tpu.pipeline_mode<synchronous>, transform_indices = @transform_7, window_bounds = array<i64: 32, 32>}, {pipeline_mode = #tpu.pipeline_mode<synchronous>, transform_indices = @transform_8, window_bounds = array<i64: 1, 32>}, {transform_indices = @transform_9, window_bounds = array<i64: 1, 4, 8, 8>}, {transform_indices = @transform_10, window_bounds = array<i64: 1, 4, 8, 8>}, {transform_indices = @transform_11, window_bounds = array<i64: 1, 4, 8, 8>}]} {
    %c0 = arith.constant 0 : index
    %c0_0 = arith.constant 0 : index
    %c0_1 = arith.constant 0 : index
    %0 = vector.load %arg2[%c0, %c0_0, %c0_1] : memref<1x8x32xf32, #tpu.memory_space<vmem>>, vector<1x8x32xf32>
    %1 = vector.shape_cast %0 : vector<1x8x32xf32> to vector<8x32xf32>
    %c0_2 = arith.constant 0 : index
    %c0_3 = arith.constant 0 : index
    %2 = vector.load %arg3[%c0_2, %c0_3] : memref<1x32xf32, #tpu.memory_space<vmem>>, vector<1x32xf32>
    %c0_4 = arith.constant 0 : index
    %c0_5 = arith.constant 0 : index
    %3 = vector.load %arg4[%c0_4, %c0_5] : memref<1x32xf32, #tpu.memory_space<vmem>>, vector<1x32xf32>
    %cst = arith.constant dense<0.000000e+00> : vector<8xf32>
    %4 = vector.multi_reduction <add>, %1, %cst [1] : vector<8x32xf32> to vector<8xf32>
    %5 = vector.shape_cast %4 : vector<8xf32> to vector<8x1xf32>
    %cst_6 = arith.constant 3.200000e+01 : f32
    %6 = vector.broadcast %cst_6 : f32 to vector<8x1xf32>
    %7 = arith.divf %5, %6 : vector<8x1xf32>
    %8 = vector.broadcast %7 : vector<8x1xf32> to vector<8x32xf32>
    %9 = arith.subf %1, %8 : vector<8x32xf32>
    %10 = arith.mulf %9, %9 : vector<8x32xf32>
    %cst_7 = arith.constant dense<0.000000e+00> : vector<8xf32>
    %11 = vector.multi_reduction <add>, %10, %cst_7 [1] : vector<8x32xf32> to vector<8xf32>
    %12 = vector.shape_cast %11 : vector<8xf32> to vector<8x1xf32>
    %cst_8 = arith.constant 3.200000e+01 : f32
    %13 = vector.broadcast %cst_8 : f32 to vector<8x1xf32>
    %14 = arith.divf %12, %13 : vector<8x1xf32>
    %cst_9 = arith.constant 9.99999974E-6 : f32
    %15 = vector.broadcast %cst_9 : f32 to vector<8x1xf32>
    %16 = arith.addf %14, %15 : vector<8x1xf32>
    %17 = math.rsqrt %16 : vector<8x1xf32>
    %18 = vector.broadcast %17 : vector<8x1xf32> to vector<8x32xf32>
    %19 = arith.mulf %9, %18 : vector<8x32xf32>
    %20 = vector.broadcast %2 : vector<1x32xf32> to vector<8x32xf32>
    %21 = arith.mulf %19, %20 : vector<8x32xf32>
    %22 = vector.broadcast %3 : vector<1x32xf32> to vector<8x32xf32>
    %23 = arith.addf %21, %22 : vector<8x32xf32>
    %24 = arith.truncf %23 : vector<8x32xf32> to vector<8x32xbf16>
    %c0_10 = arith.constant 0 : index
    %c0_11 = arith.constant 0 : index
    %25 = vector.load %arg5[%c0_10, %c0_11] : memref<32x32xbf16, #tpu.memory_space<vmem>>, vector<32x32xbf16>
    %cst_12 = arith.constant dense<0.000000e+00> : vector<8x32xf32>
    %26 = tpu.matmul %24, %25, %cst_12 {dimension_numbers = #tpu.dot_dimension_numbers<[1], [0], [0], [1], [0, 0, 1, 1], [], []>} : vector<8x32xbf16>, vector<32x32xbf16>, vector<8x32xf32> -> vector<8x32xf32>
    %c0_13 = arith.constant 0 : index
    %c0_14 = arith.constant 0 : index
    %27 = vector.load %arg6[%c0_13, %c0_14] : memref<1x32xf32, #tpu.memory_space<vmem>>, vector<1x32xf32>
    %28 = vector.broadcast %27 : vector<1x32xf32> to vector<8x32xf32>
    %29 = arith.addf %26, %28 : vector<8x32xf32>
    %cst_15 = arith.constant 0.353553385 : f32
    %30 = vector.broadcast %cst_15 : f32 to vector<8x32xf32>
    %31 = arith.mulf %29, %30 : vector<8x32xf32>
    %32 = arith.truncf %31 : vector<8x32xf32> to vector<8x32xbf16>
    %33 = vector.shape_cast %32 : vector<8x32xbf16> to vector<8x4x8xbf16>
    %34 = tpu.transpose %33, [1, 0, 2] : vector<8x4x8xbf16> -> vector<4x8x8xbf16>
    %c0_16 = arith.constant 0 : index
    %c0_17 = arith.constant 0 : index
    %c0_18 = arith.constant 0 : index
    %c0_19 = arith.constant 0 : index
    %35 = vector.load %arg11[%c0_16, %c0_17, %c0_18, %c0_19] : memref<1x4x8x8xbf16, #tpu.memory_space<vmem>>, vector<1x4x8x8xbf16>
    %36 = vector.shape_cast %35 : vector<1x4x8x8xbf16> to vector<4x8x8xbf16>
    %37 = vector.shape_cast %34 : vector<4x8x8xbf16> to vector<1x4x8x8xbf16>
    tpu.vector_store %arg11[%c0_16, %c0_17, %c0_18, %c0_19], %37 {strides = array<i32>} : memref<1x4x8x8xbf16, #tpu.memory_space<vmem>>, vector<1x4x8x8xbf16>,
    %c0_20 = arith.constant 0 : index
    %c0_21 = arith.constant 0 : index
    %38 = vector.load %arg7[%c0_20, %c0_21] : memref<32x32xbf16, #tpu.memory_space<vmem>>, vector<32x32xbf16>
    %cst_22 = arith.constant dense<0.000000e+00> : vector<8x32xf32>
    %39 = tpu.matmul %24, %38, %cst_22 {dimension_numbers = #tpu.dot_dimension_numbers<[1], [0], [0], [1], [0, 0, 1, 1], [], []>} : vector<8x32xbf16>, vector<32x32xbf16>, vector<8x32xf32> -> vector<8x32xf32>
    %c0_23 = arith.constant 0 : index
    %c0_24 = arith.constant 0 : index
    %40 = vector.load %arg8[%c0_23, %c0_24] : memref<1x32xf32, #tpu.memory_space<vmem>>, vector<1x32xf32>
    %41 = vector.broadcast %40 : vector<1x32xf32> to vector<8x32xf32>
    %42 = arith.addf %39, %41 : vector<8x32xf32>
    %43 = arith.truncf %42 : vector<8x32xf32> to vector<8x32xbf16>
    %44 = vector.shape_cast %43 : vector<8x32xbf16> to vector<8x4x8xbf16>
    %45 = tpu.transpose %44, [1, 2, 0] : vector<8x4x8xbf16> -> vector<4x8x8xbf16>
    %c0_25 = arith.constant 0 : index
    %c0_26 = arith.constant 0 : index
    %c0_27 = arith.constant 0 : index
    %c0_28 = arith.constant 0 : index
    %46 = vector.load %arg12[%c0_25, %c0_26, %c0_27, %c0_28] : memref<1x4x8x8xbf16, #tpu.memory_space<vmem>>, vector<1x4x8x8xbf16>
    %47 = vector.shape_cast %46 : vector<1x4x8x8xbf16> to vector<4x8x8xbf16>
    %48 = vector.shape_cast %45 : vector<4x8x8xbf16> to vector<1x4x8x8xbf16>
    tpu.vector_store %arg12[%c0_25, %c0_26, %c0_27, %c0_28], %48 {strides = array<i32>} : memref<1x4x8x8xbf16, #tpu.memory_space<vmem>>, vector<1x4x8x8xbf16>,
    %c0_29 = arith.constant 0 : index
    %c0_30 = arith.constant 0 : index
    %49 = vector.load %arg9[%c0_29, %c0_30] : memref<32x32xbf16, #tpu.memory_space<vmem>>, vector<32x32xbf16>
    %cst_31 = arith.constant dense<0.000000e+00> : vector<8x32xf32>
    %50 = tpu.matmul %24, %49, %cst_31 {dimension_numbers = #tpu.dot_dimension_numbers<[1], [0], [0], [1], [0, 0, 1, 1], [], []>} : vector<8x32xbf16>, vector<32x32xbf16>, vector<8x32xf32> -> vector<8x32xf32>
    %c0_32 = arith.constant 0 : index
    %c0_33 = arith.constant 0 : index
    %51 = vector.load %arg10[%c0_32, %c0_33] : memref<1x32xf32, #tpu.memory_space<vmem>>, vector<1x32xf32>
    %52 = vector.broadcast %51 : vector<1x32xf32> to vector<8x32xf32>
    %53 = arith.addf %50, %52 : vector<8x32xf32>
    %54 = arith.truncf %53 : vector<8x32xf32> to vector<8x32xbf16>
    %55 = vector.shape_cast %54 : vector<8x32xbf16> to vector<8x4x8xbf16>
    %56 = tpu.transpose %55, [1, 0, 2] : vector<8x4x8xbf16> -> vector<4x8x8xbf16>
    %c0_34 = arith.constant 0 : index
    %c0_35 = arith.constant 0 : index
    %c0_36 = arith.constant 0 : index
    %c0_37 = arith.constant 0 : index
    %57 = vector.load %arg13[%c0_34, %c0_35, %c0_36, %c0_37] : memref<1x4x8x8xbf16, #tpu.memory_space<vmem>>, vector<1x4x8x8xbf16>
    %58 = vector.shape_cast %57 : vector<1x4x8x8xbf16> to vector<4x8x8xbf16>
    %59 = vector.shape_cast %56 : vector<4x8x8xbf16> to vector<1x4x8x8xbf16>
    tpu.vector_store %arg13[%c0_34, %c0_35, %c0_36, %c0_37], %59 {strides = array<i32>} : memref<1x4x8x8xbf16, #tpu.memory_space<vmem>>, vector<1x4x8x8xbf16>,
    return
  }
  func.func @transform_0(%arg0: i32, %arg1: i32) -> (i32, i32, i32) {
    %c0_i32 = arith.constant 0 : i32
    %c0_i32_0 = arith.constant 0 : i32
    return %arg0, %arg1, %c0_i32 : i32, i32, i32
  }
  func.func @transform_1(%arg0: i32, %arg1: i32) -> (i32, i32) {
    %c0_i32 = arith.constant 0 : i32
    %c0_i32_0 = arith.constant 0 : i32
    %c0_i32_1 = arith.constant 0 : i32
    return %c0_i32, %c0_i32_0 : i32, i32
  }
  func.func @transform_2(%arg0: i32, %arg1: i32) -> (i32, i32) {
    %c0_i32 = arith.constant 0 : i32
    %c0_i32_0 = arith.constant 0 : i32
    %c0_i32_1 = arith.constant 0 : i32
    return %c0_i32, %c0_i32_0 : i32, i32
  }
  func.func @transform_3(%arg0: i32, %arg1: i32) -> (i32, i32) {
    %c0_i32 = arith.constant 0 : i32
    %c0_i32_0 = arith.constant 0 : i32
    %c0_i32_1 = arith.constant 0 : i32
    return %c0_i32, %c0_i32_0 : i32, i32
  }
  func.func @transform_4(%arg0: i32, %arg1: i32) -> (i32, i32) {
    %c0_i32 = arith.constant 0 : i32
    %c0_i32_0 = arith.constant 0 : i32
    %c0_i32_1 = arith.constant 0 : i32
    return %c0_i32, %c0_i32_0 : i32, i32
  }
  func.func @transform_5(%arg0: i32, %arg1: i32) -> (i32, i32) {
    %c0_i32 = arith.constant 0 : i32
    %c0_i32_0 = arith.constant 0 : i32
    %c0_i32_1 = arith.constant 0 : i32
    return %c0_i32, %c0_i32_0 : i32, i32
  }
  func.func @transform_6(%arg0: i32, %arg1: i32) -> (i32, i32) {
    %c0_i32 = arith.constant 0 : i32
    %c0_i32_0 = arith.constant 0 : i32
    %c0_i32_1 = arith.constant 0 : i32
    return %c0_i32, %c0_i32_0 : i32, i32
  }
  func.func @transform_7(%arg0: i32, %arg1: i32) -> (i32, i32) {
    %c0_i32 = arith.constant 0 : i32
    %c0_i32_0 = arith.constant 0 : i32
    %c0_i32_1 = arith.constant 0 : i32
    return %c0_i32, %c0_i32_0 : i32, i32
  }
  func.func @transform_8(%arg0: i32, %arg1: i32) -> (i32, i32) {
    %c0_i32 = arith.constant 0 : i32
    %c0_i32_0 = arith.constant 0 : i32
    %c0_i32_1 = arith.constant 0 : i32
    return %c0_i32, %c0_i32_0 : i32, i32
  }
  func.func @transform_9(%arg0: i32, %arg1: i32) -> (i32, i32, i32, i32) {
    %c0_i32 = arith.constant 0 : i32
    %c0_i32_0 = arith.constant 0 : i32
    %c0_i32_1 = arith.constant 0 : i32
    return %arg0, %c0_i32, %arg1, %c0_i32_0 : i32, i32, i32, i32
  }
  func.func @transform_10(%arg0: i32, %arg1: i32) -> (i32, i32, i32, i32) {
    %c0_i32 = arith.constant 0 : i32
    %c0_i32_0 = arith.constant 0 : i32
    %c0_i32_1 = arith.constant 0 : i32
    return %arg0, %c0_i32, %c0_i32_0, %arg1 : i32, i32, i32, i32
  }
  func.func @transform_11(%arg0: i32, %arg1: i32) -> (i32, i32, i32, i32) {
    %c0_i32 = arith.constant 0 : i32
    %c0_i32_0 = arith.constant 0 : i32
    %c0_i32_1 = arith.constant 0 : i32
    return %arg0, %c0_i32, %arg1, %c0_i32_0 : i32, i32, i32, i32
  }
}

</mosaic_0001>

<llo_original>
// kernel: tpu_custom_call.1
$region0: #{tpu_custom_call.1}
  #allocation0 [shape = 'u32[]', space=smem, size = 0x4, offset = 0x4, fixed_abs, tag = 'smem constant byte address 0x4 - core index']
  #allocation1 [shape = 'u32[144,128]{1,0:T(1,128)}', space=vmem, size = 0x12000, scoped, tag = 'internal scratch']
  %s0 = inlined_call_operand.hbm [shape: f32[2,8,32], index: 0, kind: input, shape index: {}]
  %s1 = inlined_call_operand.vmem [shape: f32[1,32], index: 1, kind: input, shape index: {}]
  %s2 = inlined_call_operand.vmem [shape: f32[1,32], index: 2, kind: input, shape index: {}]
  %s3 = inlined_call_operand.hbm [shape: bf16[32,32], index: 3, kind: input, shape index: {}]
  %s4 = inlined_call_operand.vmem [shape: f32[1,32], index: 4, kind: input, shape index: {}]
  %s5 = inlined_call_operand.hbm [shape: bf16[32,32], index: 5, kind: input, shape index: {}]
  %s6 = inlined_call_operand.vmem [shape: f32[1,32], index: 6, kind: input, shape index: {}]
  %s7 = inlined_call_operand.hbm [shape: bf16[32,32], index: 7, kind: input, shape index: {}]
  %s8 = inlined_call_operand.vmem [shape: f32[1,32], index: 8, kind: input, shape index: {}]
  %s9 = inlined_call_operand.hbm [shape: bf16[2,4,8,8], index: 9, kind: output, shape index: {0}]
  %s10 = inlined_call_operand.hbm [shape: bf16[2,4,8,8], index: 10, kind: output, shape index: {1}]
  %s11 = inlined_call_operand.hbm [shape: bf16[2,4,8,8], index: 11, kind: output, shape index: {2}]
  %12 = xla_tuple %s9, %s10, %s11
  %s13 = sld [smem:[#allocation0]]
  $region101: #{tpu_custom_call.1} parent=0
    _
  %s15 = ssub.s32 1, %s13
  %s16 = scalar_select 0, %s15, %s13
  $region1: #{tpu_custom_call.1} parent=0
    #allocation2 [shape = 'u8[8192]{0}', space=vmem, size = 0x2000, scoped, tag = 'input window, operand 0']
    #allocation3 [shape = 's32[2]{0}', space=sflag, size = 0x8, scoped, tag = 'scoped memory for tpu_custom_call.1']
    #allocation4 [shape = 's32[2]{0}', space=sflag, size = 0x8, scoped, tag = 'scoped memory for tpu_custom_call.1']
    #allocation5 [shape = 'u8[8192]{0}', space=vmem, size = 0x2000, scoped, tag = 'input window, operand 3, single buffered']
    #allocation6 [shape = 's32[1]{0}', space=sflag, size = 0x4, scoped, tag = 'scoped memory for tpu_custom_call.1']
    #allocation7 [shape = 'u8[8192]{0}', space=vmem, size = 0x2000, scoped, tag = 'input window, operand 5, single buffered']
    #allocation8 [shape = 'u8[8192]{0}', space=vmem, size = 0x2000, scoped, tag = 'input window, operand 7, single buffered']
    #allocation9 [shape = 's32[1]{0}', space=sflag, size = 0x4, scoped, tag = 'scoped memory for tpu_custom_call.1']
    #allocation10 [shape = 'u8[16384]{0}', space=vmem, size = 0x4000, scoped, tag = 'output window, operand 0']
    #allocation11 [shape = 'u8[16384]{0}', space=vmem, size = 0x4000, scoped, tag = 'output window, operand 1']
    #allocation12 [shape = 's32[2]{0}', space=sflag, size = 0x8, scoped, tag = 'scoped memory for tpu_custom_call.1']
    #allocation13 [shape = 'u8[16384]{0}', space=vmem, size = 0x4000, scoped, tag = 'output window, operand 2']
    %17 = vsyncpa [#allocation3], 0
    %s18 = scalar_lea.sflag [#allocation3], 1
    %19 = vsyncpa %s18, 0
    %20 = vsyncpa [#allocation6], 0
    %21 = vsyncpa [#allocation9], 0
    %22 = vsyncpa [#allocation4], 0
    %s23 = scalar_lea.sflag [#allocation4], 1
    %24 = vsyncpa %s23, 0
    %25 = vsyncpa [#allocation12], 0
    %s26 = scalar_lea.sflag [#allocation12], 1
    %27 = vsyncpa %s26, 0
    loop: start=0, step=1, limit=4
    $region2: #{tpu_custom_call.1} parent=1 // loop_pre_header
      _
    $region3: #{tpu_custom_call.1} parent=1 // loop_header
      %s29 = sphi 0, %s33
      %p30 = scmp.ge.s32.totalorder %s29, 4
      %s36 = sphi 0, %s48
      %s37 = sphi 0, %s44
      %s38 = sphi 0, %s36
      %s39 = sphi 0, %s37
      %s40 = sphi 0, %s38
      %s41 = sphi 0, %s39
      %s53 = sphi 0, %s55
      %s56 = sphi 0, %s53
      %s57 = sphi 0, %s56
      %s73 = sphi 0, %s57
      %s77 = sphi 0, %s77
      %s79 = sphi 0, %s77
      %s80 = sphi 0, %s79
      %s94 = sphi 0, %s80
      %s98 = sphi 0, %s98
      %s100 = sphi 0, %s98
      %s101 = sphi 0, %s100
      %s115 = sphi 0, %s101
      %s119 = sphi 0, %s119
      %s121 = sphi 0, %s119
      %s122 = sphi 0, %s121
      %s136 = sphi 0, %s122
      %s140 = sphi 0, %s140
      %s142 = sphi 0, %s140
      %s143 = sphi 0, %s142
      %s157 = sphi 0, %s143
      %s161 = sphi 0, %s161
      %s163 = sphi 0, %s161
      %s164 = sphi 0, %s163
      %s178 = sphi 0, %s164
      %s182 = sphi 0, %s182
      %s184 = sphi 0, %s182
      %s185 = sphi 0, %s184
      %s199 = sphi 0, %s185
      %s203 = sphi 0, %s203
      %s205 = sphi 0, %s203
      %s206 = sphi 0, %s205
      %s220 = sphi 0, %s206
      %s224 = sphi 0, %s224
      %s226 = sphi 0, %s224
      %s227 = sphi 0, %s226
      %s241 = sphi 0, %s227
      %s249 = sphi 0, %s251
      %s252 = sphi 0, %s249
      %s253 = sphi 0, %s252
      %s269 = sphi 0, %s253
      %s277 = sphi 0, %s279
      %s280 = sphi 0, %s277
      %s281 = sphi 0, %s280
      %s297 = sphi 0, %s281
      %s305 = sphi 0, %s307
      %s308 = sphi 0, %s305
      %s309 = sphi 0, %s308
      %s325 = sphi 0, %s309
    $region4: #{tpu_custom_call.1} parent=1 // loop_header_branch
      %32 = sbr.rel (%p30) target = $region8
    $region5: #{tpu_custom_call.1} parent=1 // loop_body
      %s34 = ssub.s32 %s29, 1
      %s35 = ssub.s32 %s29, 2
      %s42 = sadd.s32 1, %s37
      %p43 = scmp.ge.s32.totalorder %s42, 1
      %s44 = scalar_select %p43, 0, %s42
      %s45 = sadd.s32 1, %s36
      %s46 = scalar_select %p43, %s45, %s36
      %p47 = scmp.ge.s32.totalorder %s46, 2
      %s48 = scalar_select %p47, 0, %s46
      %s49 = ssub.s32 %s36, %s48
      %s50 = ssub.s32 %s37, %s44
      %s51 = sor.u32 %s49, %s50
      %p52 = scmp.eq.s32.totalorder %s51, 0
      %s54 = sadd.s32 %s53, 1
      %s55 = scalar_select %p52, %s53, %s54
      %p58 = pneg %p52
      %p59 = scmp.eq.s32.totalorder %s29, 1
      %p60 = por %p58, %p59
      %p61 = scmp.ne.s32.totalorder %s53, %s56
      %p62 = scmp.eq.s32.totalorder %s29, 0
      %p63 = por %p61, %p62
      %p64 = scmp.ne.s32.totalorder %s53, %s56
      %p65 = scmp.eq.s32.totalorder %s34, 1
      %p66 = por %p64, %p65
      %p67 = scmp.ne.s32.totalorder %s56, %s57
      %p68 = scmp.eq.s32.totalorder %s34, 0
      %p69 = por %p67, %p68
      %p70 = scmp.ne.s32.totalorder %s56, %s57
      %p71 = scmp.eq.s32.totalorder %s35, 1
      %p72 = por %p70, %p71
      %p74 = scmp.ne.s32.totalorder %s57, %s73
      %p75 = scmp.eq.s32.totalorder %s35, 0
      %p76 = por %p74, %p75
      %s78 = sadd.s32 %s77, 1
      %p81 = scmp.eq.s32.totalorder %s29, 1
      %p82 = scmp.ne.s32.totalorder %s77, %s79
      %p83 = scmp.eq.s32.totalorder %s29, 0
      %p84 = por %p82, %p83
      %p85 = scmp.ne.s32.totalorder %s77, %s79
      %p86 = scmp.eq.s32.totalorder %s34, 1
      %p87 = por %p85, %p86
      %p88 = scmp.ne.s32.totalorder %s79, %s80
      %p89 = scmp.eq.s32.totalorder %s34, 0
      %p90 = por %p88, %p89
      %p91 = scmp.ne.s32.totalorder %s79, %s80
      %p92 = scmp.eq.s32.totalorder %s35, 1
      %p93 = por %p91, %p92
      %p95 = scmp.ne.s32.totalorder %s80, %s94
      %p96 = scmp.eq.s32.totalorder %s35, 0
      %p97 = por %p95, %p96
      %s99 = sadd.s32 %s98, 1
      %p102 = scmp.eq.s32.totalorder %s29, 1
      %p103 = scmp.ne.s32.totalorder %s98, %s100
      %p104 = scmp.eq.s32.totalorder %s29, 0
      %p105 = por %p103, %p104
      %p106 = scmp.ne.s32.totalorder %s98, %s100
      %p107 = scmp.eq.s32.totalorder %s34, 1
      %p108 = por %p106, %p107
      %p109 = scmp.ne.s32.totalorder %s100, %s101
      %p110 = scmp.eq.s32.totalorder %s34, 0
      %p111 = por %p109, %p110
      %p112 = scmp.ne.s32.totalorder %s100, %s101
      %p113 = scmp.eq.s32.totalorder %s35, 1
      %p114 = por %p112, %p113
      %p116 = scmp.ne.s32.totalorder %s101, %s115
      %p117 = scmp.eq.s32.totalorder %s35, 0
      %p118 = por %p116, %p117
      %s120 = sadd.s32 %s119, 1
      %p123 = scmp.eq.s32.totalorder %s29, 1
      %p124 = scmp.ne.s32.totalorder %s119, %s121
      %p125 = scmp.eq.s32.totalorder %s29, 0
      %p126 = por %p124, %p125
      %p127 = scmp.ne.s32.totalorder %s119, %s121
      %p128 = scmp.eq.s32.totalorder %s34, 1
      %p129 = por %p127, %p128
      %p130 = scmp.ne.s32.totalorder %s121, %s122
      %p131 = scmp.eq.s32.totalorder %s34, 0
      %p132 = por %p130, %p131
      %p133 = scmp.ne.s32.totalorder %s121, %s122
      %p134 = scmp.eq.s32.totalorder %s35, 1
      %p135 = por %p133, %p134
      %p137 = scmp.ne.s32.totalorder %s122, %s136
      %p138 = scmp.eq.s32.totalorder %s35, 0
      %p139 = por %p137, %p138
      %s141 = sadd.s32 %s140, 1
      %p144 = scmp.eq.s32.totalorder %s29, 1
      %p145 = scmp.ne.s32.totalorder %s140, %s142
      %p146 = scmp.eq.s32.totalorder %s29, 0
      %p147 = por %p145, %p146
      %p148 = scmp.ne.s32.totalorder %s140, %s142
      %p149 = scmp.eq.s32.totalorder %s34, 1
      %p150 = por %p148, %p149
      %p151 = scmp.ne.s32.totalorder %s142, %s143
      %p152 = scmp.eq.s32.totalorder %s34, 0
      %p153 = por %p151, %p152
      %p154 = scmp.ne.s32.totalorder %s142, %s143
      %p155 = scmp.eq.s32.totalorder %s35, 1
      %p156 = por %p154, %p155
      %p158 = scmp.ne.s32.totalorder %s143, %s157
      %p159 = scmp.eq.s32.totalorder %s35, 0
      %p160 = por %p158, %p159
      %s162 = sadd.s32 %s161, 1
      %p165 = scmp.eq.s32.totalorder %s29, 1
      %p166 = scmp.ne.s32.totalorder %s161, %s163
      %p167 = scmp.eq.s32.totalorder %s29, 0
      %p168 = por %p166, %p167
      %p169 = scmp.ne.s32.totalorder %s161, %s163
      %p170 = scmp.eq.s32.totalorder %s34, 1
      %p171 = por %p169, %p170
      %p172 = scmp.ne.s32.totalorder %s163, %s164
      %p173 = scmp.eq.s32.totalorder %s34, 0
      %p174 = por %p172, %p173
      %p175 = scmp.ne.s32.totalorder %s163, %s164
      %p176 = scmp.eq.s32.totalorder %s35, 1
      %p177 = por %p175, %p176
      %p179 = scmp.ne.s32.totalorder %s164, %s178
      %p180 = scmp.eq.s32.totalorder %s35, 0
      %p181 = por %p179, %p180
      %s183 = sadd.s32 %s182, 1
      %p186 = scmp.eq.s32.totalorder %s29, 1
      %p187 = scmp.ne.s32.totalorder %s182, %s184
      %p188 = scmp.eq.s32.totalorder %s29, 0
      %p189 = por %p187, %p188
      %p190 = scmp.ne.s32.totalorder %s182, %s184
      %p191 = scmp.eq.s32.totalorder %s34, 1
      %p192 = por %p190, %p191
      %p193 = scmp.ne.s32.totalorder %s184, %s185
      %p194 = scmp.eq.s32.totalorder %s34, 0
      %p195 = por %p193, %p194
      %p196 = scmp.ne.s32.totalorder %s184, %s185
      %p197 = scmp.eq.s32.totalorder %s35, 1
      %p198 = por %p196, %p197
      %p200 = scmp.ne.s32.totalorder %s185, %s199
      %p201 = scmp.eq.s32.totalorder %s35, 0
      %p202 = por %p200, %p201
      %s204 = sadd.s32 %s203, 1
      %p207 = scmp.eq.s32.totalorder %s29, 1
      %p208 = scmp.ne.s32.totalorder %s203, %s205
      %p209 = scmp.eq.s32.totalorder %s29, 0
      %p210 = por %p208, %p209
      %p211 = scmp.ne.s32.totalorder %s203, %s205
      %p212 = scmp.eq.s32.totalorder %s34, 1
      %p213 = por %p211, %p212
      %p214 = scmp.ne.s32.totalorder %s205, %s206
      %p215 = scmp.eq.s32.totalorder %s34, 0
      %p216 = por %p214, %p215
      %p217 = scmp.ne.s32.totalorder %s205, %s206
      %p218 = scmp.eq.s32.totalorder %s35, 1
      %p219 = por %p217, %p218
      %p221 = scmp.ne.s32.totalorder %s206, %s220
      %p222 = scmp.eq.s32.totalorder %s35, 0
      %p223 = por %p221, %p222
      %s225 = sadd.s32 %s224, 1
      %p228 = scmp.eq.s32.totalorder %s29, 1
      %p229 = scmp.ne.s32.totalorder %s224, %s226
      %p230 = scmp.eq.s32.totalorder %s29, 0
      %p231 = por %p229, %p230
      %p232 = scmp.ne.s32.totalorder %s224, %s226
      %p233 = scmp.eq.s32.totalorder %s34, 1
      %p234 = por %p232, %p233
      %p235 = scmp.ne.s32.totalorder %s226, %s227
      %p236 = scmp.eq.s32.totalorder %s34, 0
      %p237 = por %p235, %p236
      %p238 = scmp.ne.s32.totalorder %s226, %s227
      %p239 = scmp.eq.s32.totalorder %s35, 1
      %p240 = por %p238, %p239
      %p242 = scmp.ne.s32.totalorder %s227, %s241
      %p243 = scmp.eq.s32.totalorder %s35, 0
      %p244 = por %p242, %p243
      %s245 = ssub.s32 %s36, %s48
      %s246 = ssub.s32 %s37, %s44
      %s247 = sor.u32 %s245, %s246
      %p248 = scmp.eq.s32.totalorder %s247, 0
      %s250 = sadd.s32 %s249, 1
      %s251 = scalar_select %p248, %s249, %s250
      %p254 = pneg %p248
      %p255 = scmp.eq.s32.totalorder %s29, 1
      %p256 = por %p254, %p255
      %p257 = scmp.ne.s32.totalorder %s249, %s252
      %p258 = scmp.eq.s32.totalorder %s29, 0
      %p259 = por %p257, %p258
      %p260 = scmp.ne.s32.totalorder %s249, %s252
      %p261 = scmp.eq.s32.totalorder %s34, 1
      %p262 = por %p260, %p261
      %p263 = scmp.ne.s32.totalorder %s252, %s253
      %p264 = scmp.eq.s32.totalorder %s34, 0
      %p265 = por %p263, %p264
      %p266 = scmp.ne.s32.totalorder %s252, %s253
      %p267 = scmp.eq.s32.totalorder %s35, 1
      %p268 = por %p266, %p267
      %p270 = scmp.ne.s32.totalorder %s253, %s269
      %p271 = scmp.eq.s32.totalorder %s35, 0
      %p272 = por %p270, %p271
      %s273 = ssub.s32 %s36, %s48
      %s274 = ssub.s32 %s37, %s44
      %s275 = sor.u32 %s273, %s274
      %p276 = scmp.eq.s32.totalorder %s275, 0
      %s278 = sadd.s32 %s277, 1
      %s279 = scalar_select %p276, %s277, %s278
      %p282 = pneg %p276
      %p283 = scmp.eq.s32.totalorder %s29, 1
      %p284 = por %p282, %p283
      %p285 = scmp.ne.s32.totalorder %s277, %s280
      %p286 = scmp.eq.s32.totalorder %s29, 0
      %p287 = por %p285, %p286
      %p288 = scmp.ne.s32.totalorder %s277, %s280
      %p289 = scmp.eq.s32.totalorder %s34, 1
      %p290 = por %p288, %p289
      %p291 = scmp.ne.s32.totalorder %s280, %s281
      %p292 = scmp.eq.s32.totalorder %s34, 0
      %p293 = por %p291, %p292
      %p294 = scmp.ne.s32.totalorder %s280, %s281
      %p295 = scmp.eq.s32.totalorder %s35, 1
      %p296 = por %p294, %p295
      %p298 = scmp.ne.s32.totalorder %s281, %s297
      %p299 = scmp.eq.s32.totalorder %s35, 0
      %p300 = por %p298, %p299
      %s301 = ssub.s32 %s36, %s48
      %s302 = ssub.s32 %s37, %s44
      %s303 = sor.u32 %s301, %s302
      %p304 = scmp.eq.s32.totalorder %s303, 0
      %s306 = sadd.s32 %s305, 1
      %s307 = scalar_select %p304, %s305, %s306
      %p310 = pneg %p304
      %p311 = scmp.eq.s32.totalorder %s29, 1
      %p312 = por %p310, %p311
      %p313 = scmp.ne.s32.totalorder %s305, %s308
      %p314 = scmp.eq.s32.totalorder %s29, 0
      %p315 = por %p313, %p314
      %p316 = scmp.ne.s32.totalorder %s305, %s308
      %p317 = scmp.eq.s32.totalorder %s34, 1
      %p318 = por %p316, %p317
      %p319 = scmp.ne.s32.totalorder %s308, %s309
      %p320 = scmp.eq.s32.totalorder %s34, 0
      %p321 = por %p319, %p320
      %p322 = scmp.ne.s32.totalorder %s308, %s309
      %p323 = scmp.eq.s32.totalorder %s35, 1
      %p324 = por %p322, %p323
      %p326 = scmp.ne.s32.totalorder %s309, %s325
      %p327 = scmp.eq.s32.totalorder %s35, 0
      %p328 = por %p326, %p327
      %p329 = scmp.le.s32.totalorder 1, %s29
      %p330 = scmp.lt.s32.totalorder %s29, 3
      %p331 = pnand %p329, %p330
      %p332 = pneg %p331
      // Predicated region
      $region9: #{tpu_custom_call.1} parent=5 // pred_check
        _
      $region10: #{tpu_custom_call.1} parent=5 // pred_check_branch
        %334 = sbr.rel (%p331) target = $region12
      $region11: #{tpu_custom_call.1} parent=5 // pred_region
        %s335 = ssub.s32 %s29, 1
        // Predicated region
        $region13: #{tpu_custom_call.1} parent=11 // pred_check
          %p336 = pneg %p90
        $region14: #{tpu_custom_call.1} parent=11 // pred_check_branch
          %338 = sbr.rel (%p336) target = $region16
        $region15: #{tpu_custom_call.1} parent=11 // pred_region
          _
        $region16: #{tpu_custom_call.1} parent=11 // pred_fallthru
          _
        // Predicated region
        $region17: #{tpu_custom_call.1} parent=11 // pred_check
          %p339 = pneg %p111
        $region18: #{tpu_custom_call.1} parent=11 // pred_check_branch
          %341 = sbr.rel (%p339) target = $region20
        $region19: #{tpu_custom_call.1} parent=11 // pred_region
          _
        $region20: #{tpu_custom_call.1} parent=11 // pred_fallthru
          _
        // Predicated region
        $region21: #{tpu_custom_call.1} parent=11 // pred_check
          %p342 = pneg %p132
        $region22: #{tpu_custom_call.1} parent=11 // pred_check_branch
          %344 = sbr.rel (%p342) target = $region24
        $region23: #{tpu_custom_call.1} parent=11 // pred_region
          %s346 = ssub.s32 256, 256
          %347 = vsyncadd [#allocation6], %s346
          %s348 = sshll.u32 [#allocation5], 4
          %s349 = int_to_ptr.vmem [resolvable:$true] %s348
          %354 = dma.hbm_to_vmem [thread:$0]  %s3, 256, %s349, [#allocation6], 64, 64, 4
        $region24: #{tpu_custom_call.1} parent=11 // pred_fallthru
          _
        // Predicated region
        $region25: #{tpu_custom_call.1} parent=11 // pred_check
          %p355 = pneg %p153
        $region26: #{tpu_custom_call.1} parent=11 // pred_check_branch
          %357 = sbr.rel (%p355) target = $region28
        $region27: #{tpu_custom_call.1} parent=11 // pred_region
          _
        $region28: #{tpu_custom_call.1} parent=11 // pred_fallthru
          _
        // Predicated region
        $region29: #{tpu_custom_call.1} parent=11 // pred_check
          %p358 = pneg %p174
        $region30: #{tpu_custom_call.1} parent=11 // pred_check_branch
          %360 = sbr.rel (%p358) target = $region32
        $region31: #{tpu_custom_call.1} parent=11 // pred_region
          %s362 = ssub.s32 256, 256
          %363 = vsyncadd [#allocation6], %s362
          %s364 = sshll.u32 [#allocation7], 4
          %s365 = int_to_ptr.vmem [resolvable:$true] %s364
          %370 = dma.hbm_to_vmem [thread:$0]  %s5, 256, %s365, [#allocation6], 64, 64, 4
        $region32: #{tpu_custom_call.1} parent=11 // pred_fallthru
          _
        // Predicated region
        $region33: #{tpu_custom_call.1} parent=11 // pred_check
          %p371 = pneg %p195
        $region34: #{tpu_custom_call.1} parent=11 // pred_check_branch
          %373 = sbr.rel (%p371) target = $region36
        $region35: #{tpu_custom_call.1} parent=11 // pred_region
          _
        $region36: #{tpu_custom_call.1} parent=11 // pred_fallthru
          _
        // Predicated region
        $region37: #{tpu_custom_call.1} parent=11 // pred_check
          %p374 = pneg %p216
        $region38: #{tpu_custom_call.1} parent=11 // pred_check_branch
          %376 = sbr.rel (%p374) target = $region40
        $region39: #{tpu_custom_call.1} parent=11 // pred_region
          %s378 = ssub.s32 256, 256
          %379 = vsyncadd [#allocation9], %s378
          %s380 = sshll.u32 [#allocation8], 4
          %s381 = int_to_ptr.vmem [resolvable:$true] %s380
          %386 = dma.hbm_to_vmem [thread:$0]  %s7, 256, %s381, [#allocation9], 64, 64, 4
        $region40: #{tpu_custom_call.1} parent=11 // pred_fallthru
          _
        // Predicated region
        $region41: #{tpu_custom_call.1} parent=11 // pred_check
          %p387 = pneg %p237
        $region42: #{tpu_custom_call.1} parent=11 // pred_check_branch
          %389 = sbr.rel (%p387) target = $region44
        $region43: #{tpu_custom_call.1} parent=11 // pred_region
          _
        $region44: #{tpu_custom_call.1} parent=11 // pred_fallthru
          _
      $region12: #{tpu_custom_call.1} parent=5 // pred_fallthru
        _
      %p390 = scmp.lt.s32.totalorder %s29, 2
      // Predicated region
      $region45: #{tpu_custom_call.1} parent=5 // pred_check
        %p391 = pneg %p390
      $region46: #{tpu_custom_call.1} parent=5 // pred_check_branch
        %393 = sbr.rel (%p391) target = $region48
      $region47: #{tpu_custom_call.1} parent=5 // pred_region
        // Predicated region
        $region49: #{tpu_custom_call.1} parent=47 // pred_check
          %p394 = pneg %p63
        $region50: #{tpu_custom_call.1} parent=47 // pred_check_branch
          %396 = sbr.rel (%p394) target = $region52
        $region51: #{tpu_custom_call.1} parent=47 // pred_region
          %s397 = sand.u32 %s53, 1
          %s398 = scalar_lea.sflag [#allocation3], %s397
          %s399 = sand.u32 %s53, 1
          %s400 = smul.addr %s399, 8
          %s401 = scalar_lea.vmem [#allocation2], %s400
          %s403 = ssub.s32 128, 128
          %404 = vsyncadd %s398, %s403
          %s405 = sadd.s32 %s37, %s36
          %s406 = smul.addr %s405, 128
          %s407 = scalar_lea.hbm %s0, %s406
          %s409 = sshll.u32 %s401, 4
          %s410 = int_to_ptr.vmem [resolvable:$true] %s409
          %412 = dma.hbm_to_vmem [thread:$0]  %s407, 128, %s410, %s398
        $region52: #{tpu_custom_call.1} parent=47 // pred_fallthru
          _
      $region48: #{tpu_custom_call.1} parent=5 // pred_fallthru
        _
      %p413 = scmp.le.s32.totalorder 1, %s29
      %p414 = scmp.lt.s32.totalorder %s29, 3
      %p415 = pnand %p413, %p414
      %p416 = pneg %p415
      // Predicated region
      $region53: #{tpu_custom_call.1} parent=5 // pred_check
        _
      $region54: #{tpu_custom_call.1} parent=5 // pred_check_branch
        %418 = sbr.rel (%p415) target = $region56
      $region55: #{tpu_custom_call.1} parent=5 // pred_region
        %s419 = ssub.s32 %s29, 1
        %s420 = sand.u32 %s56, 1
        %s421 = scalar_lea.sflag [#allocation3], %s420
        %s422 = sand.u32 %s56, 1
        %s423 = smul.addr %s422, 8
        %s424 = scalar_lea.vmem [#allocation2], %s423
        // Predicated region
        $region57: #{tpu_custom_call.1} parent=55 // pred_check
          %p425 = pneg %p69
        $region58: #{tpu_custom_call.1} parent=55 // pred_check_branch
          %427 = sbr.rel (%p425) target = $region60
        $region59: #{tpu_custom_call.1} parent=55 // pred_region
          %428 = dma.done %s421, 128
        $region60: #{tpu_custom_call.1} parent=55 // pred_fallthru
          _
        // Predicated region
        $region61: #{tpu_custom_call.1} parent=55 // pred_check
          %p429 = pneg %p132
        $region62: #{tpu_custom_call.1} parent=55 // pred_check_branch
          %431 = sbr.rel (%p429) target = $region64
        $region63: #{tpu_custom_call.1} parent=55 // pred_region
          %432 = dma.done [#allocation6], 256
        $region64: #{tpu_custom_call.1} parent=55 // pred_fallthru
          _
        // Predicated region
        $region65: #{tpu_custom_call.1} parent=55 // pred_check
          %p433 = pneg %p174
        $region66: #{tpu_custom_call.1} parent=55 // pred_check_branch
          %435 = sbr.rel (%p433) target = $region68
        $region67: #{tpu_custom_call.1} parent=55 // pred_region
          %436 = dma.done [#allocation6], 256
        $region68: #{tpu_custom_call.1} parent=55 // pred_fallthru
          _
        // Predicated region
        $region69: #{tpu_custom_call.1} parent=55 // pred_check
          %p437 = pneg %p216
        $region70: #{tpu_custom_call.1} parent=55 // pred_check_branch
          %439 = sbr.rel (%p437) target = $region72
        $region71: #{tpu_custom_call.1} parent=55 // pred_region
          %440 = dma.done [#allocation9], 256
        $region72: #{tpu_custom_call.1} parent=55 // pred_fallthru
          _
        %s441 = sand.u32 %s56, 1
        %s442 = scalar_lea.sflag [#allocation3], %s441
        %s443 = sand.u32 %s56, 1
        %s444 = smul.addr %s443, 8
        %s445 = scalar_lea.vmem [#allocation2], %s444
        %p446 = pneg %p69
        %p447 = pneg %p66
        %p448 = pneg %p90
        %p449 = pneg %p87
        %p450 = pneg %p111
        %p451 = pneg %p108
        %p452 = pneg %p132
        %p453 = pneg %p129
        %p454 = pneg %p153
        %p455 = pneg %p150
        %p456 = pneg %p174
        %p457 = pneg %p171
        %p458 = pneg %p195
        %p459 = pneg %p192
        %p460 = pneg %p216
        %p461 = pneg %p213
        %p462 = pneg %p237
        %p463 = pneg %p234
        %p464 = pneg %p265
        %p465 = pneg %p262
        %s466 = sand.u32 %s252, 1
        %s467 = scalar_lea.sflag [#allocation4], %s466
        %s468 = sand.u32 %s252, 1
        %s469 = smul.addr %s468, 16
        %s470 = scalar_lea.vmem [#allocation10], %s469
        %p471 = pneg %p293
        %p472 = pneg %p290
        %s473 = sand.u32 %s34, 1
        %s474 = scalar_lea.sflag [#allocation12], %s473
        %s475 = sand.u32 %s280, 1
        %s476 = smul.addr %s475, 16
        %s477 = scalar_lea.vmem [#allocation11], %s476
        %p478 = pneg %p321
        %p479 = pneg %p318
        %s480 = sand.u32 %s34, 1
        %s481 = scalar_lea.sflag [#allocation12], %s480
        %s482 = sand.u32 %s308, 1
        %s483 = smul.addr %s482, 16
        %s484 = scalar_lea.vmem [#allocation13], %s483
        %v486 = vld [vmem:[%s424] sm:$0xff]
        %v487 = vld [vmem:[%s1] sm:$0x1]
        %v488 = vld [vmem:[%s2] sm:$0x1]
        %vm489 = vcmask 261120
        %v490 = vsel %vm489, %v486, 0.0
        %491 = vadd.xlane.f32.xlu0 %v490
        %v492 = vpop.xlane.xlu0 %491
        %v493 = vrcp.pop 32.0
        %v494 = vmul.f32 %v492, %v493
        %v495 = vsub.f32 %v486, %v494
        %v496 = vmul.f32 %v495, %v495
        %v497 = vsel %vm489, %v496, 0.0
        %498 = vadd.xlane.f32.xlu0 %v497
        %v499 = vpop.xlane.xlu0 %498
        %v500 = vmul.f32 %v499, %v493
        %v501 = vadd.f32 %v500, 1e-05
        %v502 = vrsqrt.pop %v501
        %v503 = vmul.f32 %v495, %v502
        %v505 = vlaneseq
        %v506 = vshrl.u32 %v505, 7
        %v507 = vsub.s32 0, %v506
        %v508 = vrot.slane %v487, %v507
        %v510 = vmul.f32 %v503, %v508
        %v512 = vlaneseq
        %v513 = vshrl.u32 %v512, 7
        %v514 = vsub.s32 0, %v513
        %v515 = vrot.slane %v488, %v514
        %v517 = vadd.f32 %v510, %v515
        %v518 = vpack.c.bf16 %v517, %v517
        %v519 = vld [vmem:[#allocation5] sm:$0xf]
        %v520 = vld [vmem:[#allocation5 + $0x4] sm:$0xf]
        %v521 = vld [vmem:[#allocation5 + $0x8] sm:$0xf]
        %v522 = vld [vmem:[#allocation5 + $0xc] sm:$0xf]
        %v523 = vld [vmem:[%s4] sm:$0x1]
        %v525 = vlaneseq
        %v526 = vshrl.u32 %v525, 7
        %v527 = vsub.s32 0, %v526
        %v528 = vrot.slane %v523, %v527
        %v534 = vunpack.c.l.b16 %v519
        %v535 = vunpack.c.l.b16 %v520
        %v536 = vunpack.c.l.b16 %v521
        %v537 = vunpack.c.l.b16 %v522
        %v538 = vpack.c.b16 %v535, %v534
        %v539 = vpack.c.b16 %v537, %v536
        %v543 = vsel %vm489, %v518, 0
        %545 = vmatprep.subr.bf16.mxu0 0
        %546 = vmatpush1.bf16.msra.mxu0 0
        %547 = vmatprep.subr.bf16.mxu0 0
        %548 = vmatpush1.bf16.msra.mxu0 0
        %549 = vmatprep.subr.bf16.mxu0 0
        %550 = vmatpush1.bf16.msra.mxu0 0
        %551 = vmatprep.subr.bf16.mxu0 0
        %552 = vmatpush1.bf16.msra.mxu0 0
        %553 = vmatprep.subr.bf16.mxu0 0
        %554 = vmatpush1.bf16.msra.mxu0 0
        %555 = vmatprep.subr.bf16.mxu0 0
        %556 = vmatpush1.bf16.msra.mxu0 0
        %557 = vmatprep.subr.bf16.mxu0 0
        %558 = vmatpush1.bf16.msra.mxu0 %v539
        %559 = vmatprep.subr.bf16.mxu0 0
        %560 = vmatpush1.bf16.msra.mxu0 %v538
        %561 = vmatprep.subr.bf16.mxu0 0
        %562 = vmatpush2.bf16.msra.mxu0 0
        %563 = vmatprep.subr.bf16.mxu0 0
        %564 = vmatpush2.bf16.msra.mxu0 0
        %565 = vmatprep.subr.bf16.mxu0 0
        %566 = vmatpush2.bf16.msra.mxu0 0
        %567 = vmatprep.subr.bf16.mxu0 0
        %568 = vmatpush2.bf16.msra.mxu0 0
        %569 = vmatprep.subr.bf16.mxu0 0
        %570 = vmatpush2.bf16.msra.mxu0 0
        %571 = vmatprep.subr.bf16.mxu0 0
        %572 = vmatpush2.bf16.msra.mxu0 0
        %573 = vmatprep.subr.bf16.mxu0 0
        %574 = vmatpush2.bf16.msra.mxu0 0
        %575 = vmatprep.subr.bf16.mxu0 0
        %576 = vmatpush2.bf16.msra.mxu0 0
        %577 = vmatprep.mubr.bf16.mxu0 0
        %578 = vmatmul.mubr.bf16.gmra.mxu0 %v543
        %v579 = vpop.f32.mrf.mxu0
        %v580 = vadd.f32 %v528, %v579
        %v581 = vpop.f32.mrf.mxu0
        %v582 = vpop.f32.mrf.mxu0
        %v583 = vpop.f32.mrf.mxu0
        %584 = vdwg.mxu0
        %v585 = vmul.f32 %v580, 0.35355338
        %v586 = vpack.c.bf16 %v585, %v585
        %588 = vrot.lane.b32.xlu0 %v586, 120
        %v589 = vpop.permute.xlu0 %588
        %590 = vrot.lane.b32.xlu0 %v586, 112
        %v591 = vpop.permute.xlu0 %590
        %592 = vrot.lane.b32.xlu0 %v586, 104
        %v593 = vpop.permute.xlu0 %592
        %v595 = vunpack.c.l.s4 1983009808
        %v596 = vunpack.c.0.s8 %v595
        %v597 = vlaneseq
        %v598 = vshrl.u32 %v597, 7
        %v599 = vsub.s32 %v596, %v598
        %v600 = vrot.slane %v586, %v599
        %v603 = vunpack.c.l.s4 1983009808
        %v604 = vunpack.c.0.s8 %v603
        %v605 = vlaneseq
        %v606 = vshrl.u32 %v605, 7
        %v607 = vsub.s32 %v604, %v606
        %v608 = vrot.slane %v591, %v607
        %v609 = vcombine.low %v600, %v608
        %v610 = vcombine.high %v600, %v608
        %v612 = vunpack.c.l.s4 1934713408
        %v613 = vunpack.c.0.s8 %v612
        %v614 = vlaneseq
        %v615 = vshrl.u32 %v614, 7
        %v616 = vsub.s32 %v613, %v615
        %v617 = vrot.slane %v609, %v616
        %v619 = vunpack.c.l.s4 1934713408
        %v620 = vunpack.c.0.s8 %v619
        %v621 = vlaneseq
        %v622 = vshrl.u32 %v621, 7
        %v623 = vsub.s32 %v620, %v622
        %v624 = vrot.slane %v610, %v623
        %v625 = vcombine.high %v617, 0
        %v626 = vcombine.high %v624, 0
        %v629 = vunpack.c.l.s4 1983009808
        %v630 = vunpack.c.0.s8 %v629
        %v631 = vlaneseq
        %v632 = vshrl.u32 %v631, 7
        %v633 = vsub.s32 %v630, %v632
        %v634 = vrot.slane %v589, %v633
        %v637 = vunpack.c.l.s4 1983009808
        %v638 = vunpack.c.0.s8 %v637
        %v639 = vlaneseq
        %v640 = vshrl.u32 %v639, 7
        %v641 = vsub.s32 %v638, %v640
        %v642 = vrot.slane %v593, %v641
        %v643 = vcombine.low %v634, %v642
        %v644 = vcombine.high %v634, %v642
        %v646 = vunpack.c.l.s4 1934713408
        %v647 = vunpack.c.0.s8 %v646
        %v648 = vlaneseq
        %v649 = vshrl.u32 %v648, 7
        %v650 = vsub.s32 %v647, %v649
        %v651 = vrot.slane %v643, %v650
        %v653 = vunpack.c.l.s4 1934713408
        %v654 = vunpack.c.0.s8 %v653
        %v655 = vlaneseq
        %v656 = vshrl.u32 %v655, 7
        %v657 = vsub.s32 %v654, %v656
        %v658 = vrot.slane %v644, %v657
        %v659 = vcombine.high %v651, 0
        %v660 = vcombine.high %v658, 0
        %v663 = vpack.i.b16 %v651, %v617
        %v665 = vshrl.u32 %v617, 16
        %v666 = vshrl.u32 %v651, 16
        %v667 = vpack.i.b16 %v666, %v665
        %v671 = vpack.i.b16 %v659, %v625
        %v673 = vshrl.u32 %v625, 16
        %v674 = vshrl.u32 %v659, 16
        %v675 = vpack.i.b16 %v674, %v673
        %v679 = vpack.i.b16 %v658, %v624
        %v681 = vshrl.u32 %v624, 16
        %v682 = vshrl.u32 %v658, 16
        %v683 = vpack.i.b16 %v682, %v681
        %v687 = vpack.i.b16 %v660, %v626
        %v689 = vshrl.u32 %v626, 16
        %v690 = vshrl.u32 %v660, 16
        %v691 = vpack.i.b16 %v690, %v689
        %v693 = vcombine.low %v663, %v679
        %v695 = vunpack.c.l.s4 1983009808
        %v696 = vunpack.c.0.s8 %v695
        %v697 = vlaneseq
        %v698 = vshrl.u32 %v697, 7
        %v699 = vsub.s32 %v696, %v698
        %v700 = vrot.slane %v693, %v699
        %v701 = vcombine.low %v671, %v687
        %v703 = vunpack.c.l.s4 1983009808
        %v704 = vunpack.c.0.s8 %v703
        %v705 = vlaneseq
        %v706 = vshrl.u32 %v705, 7
        %v707 = vsub.s32 %v704, %v706
        %v708 = vrot.slane %v701, %v707
        %v709 = vcombine.low %v700, %v708
        %v711 = vunpack.c.l.s4 1934713408
        %v712 = vunpack.c.0.s8 %v711
        %v713 = vlaneseq
        %v714 = vshrl.u32 %v713, 7
        %v715 = vsub.s32 %v712, %v714
        %v716 = vrot.slane %v709, %v715
        %v717 = vcombine.high %v716, 0
        %v718 = vcombine.low %v667, %v683
        %v720 = vunpack.c.l.s4 1983009808
        %v721 = vunpack.c.0.s8 %v720
        %v722 = vlaneseq
        %v723 = vshrl.u32 %v722, 7
        %v724 = vsub.s32 %v721, %v723
        %v725 = vrot.slane %v718, %v724
        %v726 = vcombine.low %v675, %v691
        %v728 = vunpack.c.l.s4 1983009808
        %v729 = vunpack.c.0.s8 %v728
        %v730 = vlaneseq
        %v731 = vshrl.u32 %v730, 7
        %v732 = vsub.s32 %v729, %v731
        %v733 = vrot.slane %v726, %v732
        %v734 = vcombine.low %v725, %v733
        %v736 = vunpack.c.l.s4 1934713408
        %v737 = vunpack.c.0.s8 %v736
        %v738 = vlaneseq
        %v739 = vshrl.u32 %v738, 7
        %v740 = vsub.s32 %v737, %v739
        %v741 = vrot.slane %v734, %v740
        %v742 = vcombine.high %v741, 0
        %v745 = vpack.i.b16 %v741, %v716
        %v747 = vshrl.u32 %v716, 16
        %v748 = vshrl.u32 %v741, 16
        %v749 = vpack.i.b16 %v748, %v747
        %v753 = vpack.i.b16 %v742, %v717
        %v755 = vshrl.u32 %v717, 16
        %v756 = vshrl.u32 %v742, 16
        %v757 = vpack.i.b16 %v756, %v755
        %vm759 = vcmask 60416
        %760 = vst.msk [vmem:[%s470] sm:$0xf] %vm759, %v745
        %761 = vst.msk [vmem:[%s470 + $0x4] sm:$0xf] %vm759, %v749
        %762 = vst.msk [vmem:[%s470 + $0x8] sm:$0xf] %vm759, %v753
        %763 = vst.msk [vmem:[%s470 + $0xc] sm:$0xf] %vm759, %v757
        %v764 = vld [vmem:[#allocation7] sm:$0xf]
        %v765 = vld [vmem:[#allocation7 + $0x4] sm:$0xf]
        %v766 = vld [vmem:[#allocation7 + $0x8] sm:$0xf]
        %v767 = vld [vmem:[#allocation7 + $0xc] sm:$0xf]
        %v768 = vld [vmem:[%s6] sm:$0x1]
        %v770 = vlaneseq
        %v771 = vshrl.u32 %v770, 7
        %v772 = vsub.s32 0, %v771
        %v773 = vrot.slane %v768, %v772
        %v779 = vunpack.c.l.b16 %v764
        %v780 = vunpack.c.l.b16 %v765
        %v781 = vunpack.c.l.b16 %v766
        %v782 = vunpack.c.l.b16 %v767
        %v783 = vpack.c.b16 %v780, %v779
        %v784 = vpack.c.b16 %v782, %v781
        %787 = vmatprep.subr.bf16.mxu0 0
        %788 = vmatpush1.bf16.msra.mxu0 0
        %789 = vmatprep.subr.bf16.mxu0 0
        %790 = vmatpush1.bf16.msra.mxu0 0
        %791 = vmatprep.subr.bf16.mxu0 0
        %792 = vmatpush1.bf16.msra.mxu0 0
        %793 = vmatprep.subr.bf16.mxu0 0
        %794 = vmatpush1.bf16.msra.mxu0 0
        %795 = vmatprep.subr.bf16.mxu0 0
        %796 = vmatpush1.bf16.msra.mxu0 0
        %797 = vmatprep.subr.bf16.mxu0 0
        %798 = vmatpush1.bf16.msra.mxu0 0
        %799 = vmatprep.subr.bf16.mxu0 0
        %800 = vmatpush1.bf16.msra.mxu0 %v784
        %801 = vmatprep.subr.bf16.mxu0 0
        %802 = vmatpush1.bf16.msra.mxu0 %v783
        %803 = vmatprep.subr.bf16.mxu0 0
        %804 = vmatpush2.bf16.msra.mxu0 0
        %805 = vmatprep.subr.bf16.mxu0 0
        %806 = vmatpush2.bf16.msra.mxu0 0
        %807 = vmatprep.subr.bf16.mxu0 0
        %808 = vmatpush2.bf16.msra.mxu0 0
        %809 = vmatprep.subr.bf16.mxu0 0
        %810 = vmatpush2.bf16.msra.mxu0 0
        %811 = vmatprep.subr.bf16.mxu0 0
        %812 = vmatpush2.bf16.msra.mxu0 0
        %813 = vmatprep.subr.bf16.mxu0 0
        %814 = vmatpush2.bf16.msra.mxu0 0
        %815 = vmatprep.subr.bf16.mxu0 0
        %816 = vmatpush2.bf16.msra.mxu0 0
        %817 = vmatprep.subr.bf16.mxu0 0
        %818 = vmatpush2.bf16.msra.mxu0 0
        %819 = vmatprep.mubr.bf16.mxu0 0
        %820 = vmatmul.mubr.bf16.gmra.mxu0 %v543
        %v821 = vpop.f32.mrf.mxu0
        %v822 = vadd.f32 %v773, %v821
        %v823 = vpop.f32.mrf.mxu0
        %v824 = vpop.f32.mrf.mxu0
        %v825 = vpop.f32.mrf.mxu0
        %826 = vdwg.mxu0
        %v827 = vpack.c.bf16 %v822, %v822
        %829 = vrot.lane.b32.xlu0 %v827, 120
        %v830 = vpop.permute.xlu0 %829
        %831 = vrot.lane.b32.xlu0 %v827, 112
        %v832 = vpop.permute.xlu0 %831
        %833 = vrot.lane.b32.xlu0 %v827, 104
        %v834 = vpop.permute.xlu0 %833
        %v836 = vunpack.c.l.s4 1983009808
        %v837 = vunpack.c.0.s8 %v836
        %v838 = vlaneseq
        %v839 = vshrl.u32 %v838, 7
        %v840 = vsub.s32 %v837, %v839
        %v841 = vrot.slane %v827, %v840
        %v844 = vunpack.c.l.s4 1983009808
        %v845 = vunpack.c.0.s8 %v844
        %v846 = vlaneseq
        %v847 = vshrl.u32 %v846, 7
        %v848 = vsub.s32 %v845, %v847
        %v849 = vrot.slane %v832, %v848
        %v850 = vcombine.low %v841, %v849
        %v851 = vcombine.high %v841, %v849
        %v853 = vunpack.c.l.s4 1934713408
        %v854 = vunpack.c.0.s8 %v853
        %v855 = vlaneseq
        %v856 = vshrl.u32 %v855, 7
        %v857 = vsub.s32 %v854, %v856
        %v858 = vrot.slane %v850, %v857
        %v860 = vunpack.c.l.s4 1934713408
        %v861 = vunpack.c.0.s8 %v860
        %v862 = vlaneseq
        %v863 = vshrl.u32 %v862, 7
        %v864 = vsub.s32 %v861, %v863
        %v865 = vrot.slane %v851, %v864
        %v866 = vcombine.high %v858, 0
        %v867 = vcombine.high %v865, 0
        %v870 = vunpack.c.l.s4 1983009808
        %v871 = vunpack.c.0.s8 %v870
        %v872 = vlaneseq
        %v873 = vshrl.u32 %v872, 7
        %v874 = vsub.s32 %v871, %v873
        %v875 = vrot.slane %v830, %v874
        %v878 = vunpack.c.l.s4 1983009808
        %v879 = vunpack.c.0.s8 %v878
        %v880 = vlaneseq
        %v881 = vshrl.u32 %v880, 7
        %v882 = vsub.s32 %v879, %v881
        %v883 = vrot.slane %v834, %v882
        %v884 = vcombine.low %v875, %v883
        %v885 = vcombine.high %v875, %v883
        %v887 = vunpack.c.l.s4 1934713408
        %v888 = vunpack.c.0.s8 %v887
        %v889 = vlaneseq
        %v890 = vshrl.u32 %v889, 7
        %v891 = vsub.s32 %v888, %v890
        %v892 = vrot.slane %v884, %v891
        %v894 = vunpack.c.l.s4 1934713408
        %v895 = vunpack.c.0.s8 %v894
        %v896 = vlaneseq
        %v897 = vshrl.u32 %v896, 7
        %v898 = vsub.s32 %v895, %v897
        %v899 = vrot.slane %v885, %v898
        %v900 = vcombine.high %v892, 0
        %v901 = vcombine.high %v899, 0
        %v904 = vpack.i.b16 %v892, %v858
        %v906 = vshrl.u32 %v858, 16
        %v907 = vshrl.u32 %v892, 16
        %v908 = vpack.i.b16 %v907, %v906
        %v912 = vpack.i.b16 %v900, %v866
        %v914 = vshrl.u32 %v866, 16
        %v915 = vshrl.u32 %v900, 16
        %v916 = vpack.i.b16 %v915, %v914
        %v920 = vpack.i.b16 %v899, %v865
        %v922 = vshrl.u32 %v865, 16
        %v923 = vshrl.u32 %v899, 16
        %v924 = vpack.i.b16 %v923, %v922
        %v928 = vpack.i.b16 %v901, %v867
        %v930 = vshrl.u32 %v867, 16
        %v931 = vshrl.u32 %v901, 16
        %v932 = vpack.i.b16 %v931, %v930
        %934 = vxpose.xlu0.c.b16.start [1/8] %v904, 128
        %935 = vxpose.xlu0.c.b16.cont [2/8] 0, 128
        %936 = vxpose.xlu0.c.b16.cont [3/8] 0, 128
        %937 = vxpose.xlu0.c.b16.cont [4/8] 0, 128
        %938 = vxpose.xlu0.c.b16.cont [5/8] 0, 128
        %939 = vxpose.xlu0.c.b16.cont [6/8] 0, 128
        %940 = vxpose.xlu0.c.b16.cont [7/8] 0, 128
        %941 = vxpose.xlu0.c.b16.end [8/8] 0, 128
        %v942 = vpop.trf.xlu0
        %v943 = vpop.trf.xlu0
        %v944 = vpop.trf.xlu0
        %v945 = vpop.trf.xlu0
        %v946 = vpop.trf.xlu0
        %v947 = vpop.trf.xlu0
        %v948 = vpop.trf.xlu0
        %v949 = vpop.trf.xlu0
        %950 = vxpose.xlu0.c.b16.start [1/8] %v908, 128
        %951 = vxpose.xlu0.c.b16.cont [2/8] 0, 128
        %952 = vxpose.xlu0.c.b16.cont [3/8] 0, 128
        %953 = vxpose.xlu0.c.b16.cont [4/8] 0, 128
        %954 = vxpose.xlu0.c.b16.cont [5/8] 0, 128
        %955 = vxpose.xlu0.c.b16.cont [6/8] 0, 128
        %956 = vxpose.xlu0.c.b16.cont [7/8] 0, 128
        %957 = vxpose.xlu0.c.b16.end [8/8] 0, 128
        %v958 = vpop.trf.xlu0
        %v959 = vpop.trf.xlu0
        %v960 = vpop.trf.xlu0
        %v961 = vpop.trf.xlu0
        %v962 = vpop.trf.xlu0
        %v963 = vpop.trf.xlu0
        %v964 = vpop.trf.xlu0
        %v965 = vpop.trf.xlu0
        %966 = vxpose.xlu0.c.b16.start [1/8] %v912, 128
        %967 = vxpose.xlu0.c.b16.cont [2/8] 0, 128
        %968 = vxpose.xlu0.c.b16.cont [3/8] 0, 128
        %969 = vxpose.xlu0.c.b16.cont [4/8] 0, 128
        %970 = vxpose.xlu0.c.b16.cont [5/8] 0, 128
        %971 = vxpose.xlu0.c.b16.cont [6/8] 0, 128
        %972 = vxpose.xlu0.c.b16.cont [7/8] 0, 128
        %973 = vxpose.xlu0.c.b16.end [8/8] 0, 128
        %v974 = vpop.trf.xlu0
        %v975 = vpop.trf.xlu0
        %v976 = vpop.trf.xlu0
        %v977 = vpop.trf.xlu0
        %v978 = vpop.trf.xlu0
        %v979 = vpop.trf.xlu0
        %v980 = vpop.trf.xlu0
        %v981 = vpop.trf.xlu0
        %982 = vxpose.xlu0.c.b16.start [1/8] %v916, 128
        %983 = vxpose.xlu0.c.b16.cont [2/8] 0, 128
        %984 = vxpose.xlu0.c.b16.cont [3/8] 0, 128
        %985 = vxpose.xlu0.c.b16.cont [4/8] 0, 128
        %986 = vxpose.xlu0.c.b16.cont [5/8] 0, 128
        %987 = vxpose.xlu0.c.b16.cont [6/8] 0, 128
        %988 = vxpose.xlu0.c.b16.cont [7/8] 0, 128
        %989 = vxpose.xlu0.c.b16.end [8/8] 0, 128
        %v990 = vpop.trf.xlu0
        %v991 = vpop.trf.xlu0
        %v992 = vpop.trf.xlu0
        %v993 = vpop.trf.xlu0
        %v994 = vpop.trf.xlu0
        %v995 = vpop.trf.xlu0
        %v996 = vpop.trf.xlu0
        %v997 = vpop.trf.xlu0
        %998 = vxpose.xlu0.c.b16.start [1/8] %v920, 128
        %999 = vxpose.xlu0.c.b16.cont [2/8] 0, 128
        %1000 = vxpose.xlu0.c.b16.cont [3/8] 0, 128
        %1001 = vxpose.xlu0.c.b16.cont [4/8] 0, 128
        %1002 = vxpose.xlu0.c.b16.cont [5/8] 0, 128
        %1003 = vxpose.xlu0.c.b16.cont [6/8] 0, 128
        %1004 = vxpose.xlu0.c.b16.cont [7/8] 0, 128
        %1005 = vxpose.xlu0.c.b16.end [8/8] 0, 128
        %v1006 = vpop.trf.xlu0
        %v1007 = vpop.trf.xlu0
        %v1008 = vpop.trf.xlu0
        %v1009 = vpop.trf.xlu0
        %v1010 = vpop.trf.xlu0
        %v1011 = vpop.trf.xlu0
        %v1012 = vpop.trf.xlu0
        %v1013 = vpop.trf.xlu0
        %1014 = vxpose.xlu0.c.b16.start [1/8] %v924, 128
        %1015 = vxpose.xlu0.c.b16.cont [2/8] 0, 128
        %1016 = vxpose.xlu0.c.b16.cont [3/8] 0, 128
        %1017 = vxpose.xlu0.c.b16.cont [4/8] 0, 128
        %1018 = vxpose.xlu0.c.b16.cont [5/8] 0, 128
        %1019 = vxpose.xlu0.c.b16.cont [6/8] 0, 128
        %1020 = vxpose.xlu0.c.b16.cont [7/8] 0, 128
        %1021 = vxpose.xlu0.c.b16.end [8/8] 0, 128
        %v1022 = vpop.trf.xlu0
        %v1023 = vpop.trf.xlu0
        %v1024 = vpop.trf.xlu0
        %v1025 = vpop.trf.xlu0
        %v1026 = vpop.trf.xlu0
        %v1027 = vpop.trf.xlu0
        %v1028 = vpop.trf.xlu0
        %v1029 = vpop.trf.xlu0
        %1030 = vxpose.xlu0.c.b16.start [1/8] %v928, 128
        %1031 = vxpose.xlu0.c.b16.cont [2/8] 0, 128
        %1032 = vxpose.xlu0.c.b16.cont [3/8] 0, 128
        %1033 = vxpose.xlu0.c.b16.cont [4/8] 0, 128
        %1034 = vxpose.xlu0.c.b16.cont [5/8] 0, 128
        %1035 = vxpose.xlu0.c.b16.cont [6/8] 0, 128
        %1036 = vxpose.xlu0.c.b16.cont [7/8] 0, 128
        %1037 = vxpose.xlu0.c.b16.end [8/8] 0, 128
        %v1038 = vpop.trf.xlu0
        %v1039 = vpop.trf.xlu0
        %v1040 = vpop.trf.xlu0
        %v1041 = vpop.trf.xlu0
        %v1042 = vpop.trf.xlu0
        %v1043 = vpop.trf.xlu0
        %v1044 = vpop.trf.xlu0
        %v1045 = vpop.trf.xlu0
        %1046 = vxpose.xlu0.c.b16.start [1/8] %v932, 128
        %1047 = vxpose.xlu0.c.b16.cont [2/8] 0, 128
        %1048 = vxpose.xlu0.c.b16.cont [3/8] 0, 128
        %1049 = vxpose.xlu0.c.b16.cont [4/8] 0, 128
        %1050 = vxpose.xlu0.c.b16.cont [5/8] 0, 128
        %1051 = vxpose.xlu0.c.b16.cont [6/8] 0, 128
        %1052 = vxpose.xlu0.c.b16.cont [7/8] 0, 128
        %1053 = vxpose.xlu0.c.b16.end [8/8] 0, 128
        %v1054 = vpop.trf.xlu0
        %v1055 = vpop.trf.xlu0
        %v1056 = vpop.trf.xlu0
        %v1057 = vpop.trf.xlu0
        %v1058 = vpop.trf.xlu0
        %v1059 = vpop.trf.xlu0
        %v1060 = vpop.trf.xlu0
        %v1061 = vpop.trf.xlu0
        %v1062 = vcombine.low %v942, %v1006
        %v1064 = vunpack.c.l.s4 1983009808
        %v1065 = vunpack.c.0.s8 %v1064
        %v1066 = vlaneseq
        %v1067 = vshrl.u32 %v1066, 7
        %v1068 = vsub.s32 %v1065, %v1067
        %v1069 = vrot.slane %v1062, %v1068
        %v1070 = vcombine.low %v974, %v1038
        %v1072 = vunpack.c.l.s4 1983009808
        %v1073 = vunpack.c.0.s8 %v1072
        %v1074 = vlaneseq
        %v1075 = vshrl.u32 %v1074, 7
        %v1076 = vsub.s32 %v1073, %v1075
        %v1077 = vrot.slane %v1070, %v1076
        %v1078 = vcombine.low %v1069, %v1077
        %v1079 = vcombine.high %v1069, %v1077
        %v1081 = vunpack.c.l.s4 1934713408
        %v1082 = vunpack.c.0.s8 %v1081
        %v1083 = vlaneseq
        %v1084 = vshrl.u32 %v1083, 7
        %v1085 = vsub.s32 %v1082, %v1084
        %v1086 = vrot.slane %v1078, %v1085
        %v1088 = vunpack.c.l.s4 1934713408
        %v1089 = vunpack.c.0.s8 %v1088
        %v1090 = vlaneseq
        %v1091 = vshrl.u32 %v1090, 7
        %v1092 = vsub.s32 %v1089, %v1091
        %v1093 = vrot.slane %v1079, %v1092
        %v1094 = vcombine.high %v1086, 0
        %v1095 = vcombine.high %v1093, 0
        %v1096 = vcombine.low %v958, %v1022
        %v1098 = vunpack.c.l.s4 1983009808
        %v1099 = vunpack.c.0.s8 %v1098
        %v1100 = vlaneseq
        %v1101 = vshrl.u32 %v1100, 7
        %v1102 = vsub.s32 %v1099, %v1101
        %v1103 = vrot.slane %v1096, %v1102
        %v1104 = vcombine.low %v990, %v1054
        %v1106 = vunpack.c.l.s4 1983009808
        %v1107 = vunpack.c.0.s8 %v1106
        %v1108 = vlaneseq
        %v1109 = vshrl.u32 %v1108, 7
        %v1110 = vsub.s32 %v1107, %v1109
        %v1111 = vrot.slane %v1104, %v1110
        %v1112 = vcombine.low %v1103, %v1111
        %v1113 = vcombine.high %v1103, %v1111
        %v1115 = vunpack.c.l.s4 1934713408
        %v1116 = vunpack.c.0.s8 %v1115
        %v1117 = vlaneseq
        %v1118 = vshrl.u32 %v1117, 7
        %v1119 = vsub.s32 %v1116, %v1118
        %v1120 = vrot.slane %v1112, %v1119
        %v1122 = vunpack.c.l.s4 1934713408
        %v1123 = vunpack.c.0.s8 %v1122
        %v1124 = vlaneseq
        %v1125 = vshrl.u32 %v1124, 7
        %v1126 = vsub.s32 %v1123, %v1125
        %v1127 = vrot.slane %v1113, %v1126
        %v1128 = vcombine.high %v1120, 0
        %v1129 = vcombine.high %v1127, 0
        %v1132 = vpack.i.b16 %v1120, %v1086
        %v1134 = vshrl.u32 %v1086, 16
        %v1135 = vshrl.u32 %v1120, 16
        %v1136 = vpack.i.b16 %v1135, %v1134
        %v1140 = vpack.i.b16 %v1128, %v1094
        %v1142 = vshrl.u32 %v1094, 16
        %v1143 = vshrl.u32 %v1128, 16
        %v1144 = vpack.i.b16 %v1143, %v1142
        %v1148 = vpack.i.b16 %v1127, %v1093
        %v1150 = vshrl.u32 %v1093, 16
        %v1151 = vshrl.u32 %v1127, 16
        %v1152 = vpack.i.b16 %v1151, %v1150
        %v1156 = vpack.i.b16 %v1129, %v1095
        %v1158 = vshrl.u32 %v1095, 16
        %v1159 = vshrl.u32 %v1129, 16
        %v1160 = vpack.i.b16 %v1159, %v1158
        %1162 = vxpose.xlu0.c.b16.start [1/8] %v1132, 128
        %1163 = vxpose.xlu0.c.b16.cont [2/8] 0, 128
        %1164 = vxpose.xlu0.c.b16.cont [3/8] 0, 128
        %1165 = vxpose.xlu0.c.b16.cont [4/8] 0, 128
        %1166 = vxpose.xlu0.c.b16.cont [5/8] 0, 128
        %1167 = vxpose.xlu0.c.b16.cont [6/8] 0, 128
        %1168 = vxpose.xlu0.c.b16.cont [7/8] 0, 128
        %1169 = vxpose.xlu0.c.b16.end [8/8] 0, 128
        %v1170 = vpop.trf.xlu0
        %v1171 = vpop.trf.xlu0
        %v1172 = vpop.trf.xlu0
        %v1173 = vpop.trf.xlu0
        %v1174 = vpop.trf.xlu0
        %v1175 = vpop.trf.xlu0
        %v1176 = vpop.trf.xlu0
        %v1177 = vpop.trf.xlu0
        %1178 = vxpose.xlu0.c.b16.start [1/8] %v1136, 128
        %1179 = vxpose.xlu0.c.b16.cont [2/8] 0, 128
        %1180 = vxpose.xlu0.c.b16.cont [3/8] 0, 128
        %1181 = vxpose.xlu0.c.b16.cont [4/8] 0, 128
        %1182 = vxpose.xlu0.c.b16.cont [5/8] 0, 128
        %1183 = vxpose.xlu0.c.b16.cont [6/8] 0, 128
        %1184 = vxpose.xlu0.c.b16.cont [7/8] 0, 128
        %1185 = vxpose.xlu0.c.b16.end [8/8] 0, 128
        %v1186 = vpop.trf.xlu0
        %v1187 = vpop.trf.xlu0
        %v1188 = vpop.trf.xlu0
        %v1189 = vpop.trf.xlu0
        %v1190 = vpop.trf.xlu0
        %v1191 = vpop.trf.xlu0
        %v1192 = vpop.trf.xlu0
        %v1193 = vpop.trf.xlu0
        %1194 = vxpose.xlu0.c.b16.start [1/8] %v1140, 128
        %1195 = vxpose.xlu0.c.b16.cont [2/8] 0, 128
        %1196 = vxpose.xlu0.c.b16.cont [3/8] 0, 128
        %1197 = vxpose.xlu0.c.b16.cont [4/8] 0, 128
        %1198 = vxpose.xlu0.c.b16.cont [5/8] 0, 128
        %1199 = vxpose.xlu0.c.b16.cont [6/8] 0, 128
        %1200 = vxpose.xlu0.c.b16.cont [7/8] 0, 128
        %1201 = vxpose.xlu0.c.b16.end [8/8] 0, 128
        %v1202 = vpop.trf.xlu0
        %v1203 = vpop.trf.xlu0
        %v1204 = vpop.trf.xlu0
        %v1205 = vpop.trf.xlu0
        %v1206 = vpop.trf.xlu0
        %v1207 = vpop.trf.xlu0
        %v1208 = vpop.trf.xlu0
        %v1209 = vpop.trf.xlu0
        %1210 = vxpose.xlu0.c.b16.start [1/8] %v1144, 128
        %1211 = vxpose.xlu0.c.b16.cont [2/8] 0, 128
        %1212 = vxpose.xlu0.c.b16.cont [3/8] 0, 128
        %1213 = vxpose.xlu0.c.b16.cont [4/8] 0, 128
        %1214 = vxpose.xlu0.c.b16.cont [5/8] 0, 128
        %1215 = vxpose.xlu0.c.b16.cont [6/8] 0, 128
        %1216 = vxpose.xlu0.c.b16.cont [7/8] 0, 128
        %1217 = vxpose.xlu0.c.b16.end [8/8] 0, 128
        %v1218 = vpop.trf.xlu0
        %v1219 = vpop.trf.xlu0
        %v1220 = vpop.trf.xlu0
        %v1221 = vpop.trf.xlu0
        %v1222 = vpop.trf.xlu0
        %v1223 = vpop.trf.xlu0
        %v1224 = vpop.trf.xlu0
        %v1225 = vpop.trf.xlu0
        %1226 = vxpose.xlu0.c.b16.start [1/8] %v1148, 128
        %1227 = vxpose.xlu0.c.b16.cont [2/8] 0, 128
        %1228 = vxpose.xlu0.c.b16.cont [3/8] 0, 128
        %1229 = vxpose.xlu0.c.b16.cont [4/8] 0, 128
        %1230 = vxpose.xlu0.c.b16.cont [5/8] 0, 128
        %1231 = vxpose.xlu0.c.b16.cont [6/8] 0, 128
        %1232 = vxpose.xlu0.c.b16.cont [7/8] 0, 128
        %1233 = vxpose.xlu0.c.b16.end [8/8] 0, 128
        %v1234 = vpop.trf.xlu0
        %v1235 = vpop.trf.xlu0
        %v1236 = vpop.trf.xlu0
        %v1237 = vpop.trf.xlu0
        %v1238 = vpop.trf.xlu0
        %v1239 = vpop.trf.xlu0
        %v1240 = vpop.trf.xlu0
        %v1241 = vpop.trf.xlu0
        %1242 = vxpose.xlu0.c.b16.start [1/8] %v1152, 128
        %1243 = vxpose.xlu0.c.b16.cont [2/8] 0, 128
        %1244 = vxpose.xlu0.c.b16.cont [3/8] 0, 128
        %1245 = vxpose.xlu0.c.b16.cont [4/8] 0, 128
        %1246 = vxpose.xlu0.c.b16.cont [5/8] 0, 128
        %1247 = vxpose.xlu0.c.b16.cont [6/8] 0, 128
        %1248 = vxpose.xlu0.c.b16.cont [7/8] 0, 128
        %1249 = vxpose.xlu0.c.b16.end [8/8] 0, 128
        %v1250 = vpop.trf.xlu0
        %v1251 = vpop.trf.xlu0
        %v1252 = vpop.trf.xlu0
        %v1253 = vpop.trf.xlu0
        %v1254 = vpop.trf.xlu0
        %v1255 = vpop.trf.xlu0
        %v1256 = vpop.trf.xlu0
        %v1257 = vpop.trf.xlu0
        %1258 = vxpose.xlu0.c.b16.start [1/8] %v1156, 128
        %1259 = vxpose.xlu0.c.b16.cont [2/8] 0, 128
        %1260 = vxpose.xlu0.c.b16.cont [3/8] 0, 128
        %1261 = vxpose.xlu0.c.b16.cont [4/8] 0, 128
        %1262 = vxpose.xlu0.c.b16.cont [5/8] 0, 128
        %1263 = vxpose.xlu0.c.b16.cont [6/8] 0, 128
        %1264 = vxpose.xlu0.c.b16.cont [7/8] 0, 128
        %1265 = vxpose.xlu0.c.b16.end [8/8] 0, 128
        %v1266 = vpop.trf.xlu0
        %v1267 = vpop.trf.xlu0
        %v1268 = vpop.trf.xlu0
        %v1269 = vpop.trf.xlu0
        %v1270 = vpop.trf.xlu0
        %v1271 = vpop.trf.xlu0
        %v1272 = vpop.trf.xlu0
        %v1273 = vpop.trf.xlu0
        %1274 = vxpose.xlu0.c.b16.start [1/8] %v1160, 128
        %1275 = vxpose.xlu0.c.b16.cont [2/8] 0, 128
        %1276 = vxpose.xlu0.c.b16.cont [3/8] 0, 128
        %1277 = vxpose.xlu0.c.b16.cont [4/8] 0, 128
        %1278 = vxpose.xlu0.c.b16.cont [5/8] 0, 128
        %1279 = vxpose.xlu0.c.b16.cont [6/8] 0, 128
        %1280 = vxpose.xlu0.c.b16.cont [7/8] 0, 128
        %1281 = vxpose.xlu0.c.b16.end [8/8] 0, 128
        %v1282 = vpop.trf.xlu0
        %v1283 = vpop.trf.xlu0
        %v1284 = vpop.trf.xlu0
        %v1285 = vpop.trf.xlu0
        %v1286 = vpop.trf.xlu0
        %v1287 = vpop.trf.xlu0
        %v1288 = vpop.trf.xlu0
        %v1289 = vpop.trf.xlu0
        %v1290 = vcombine.low %v1170, %v1234
        %v1292 = vunpack.c.l.s4 1983009808
        %v1293 = vunpack.c.0.s8 %v1292
        %v1294 = vlaneseq
        %v1295 = vshrl.u32 %v1294, 7
        %v1296 = vsub.s32 %v1293, %v1295
        %v1297 = vrot.slane %v1290, %v1296
        %v1298 = vcombine.low %v1202, %v1266
        %v1300 = vunpack.c.l.s4 1983009808
        %v1301 = vunpack.c.0.s8 %v1300
        %v1302 = vlaneseq
        %v1303 = vshrl.u32 %v1302, 7
        %v1304 = vsub.s32 %v1301, %v1303
        %v1305 = vrot.slane %v1298, %v1304
        %v1306 = vcombine.low %v1297, %v1305
        %v1308 = vunpack.c.l.s4 1934713408
        %v1309 = vunpack.c.0.s8 %v1308
        %v1310 = vlaneseq
        %v1311 = vshrl.u32 %v1310, 7
        %v1312 = vsub.s32 %v1309, %v1311
        %v1313 = vrot.slane %v1306, %v1312
        %v1314 = vcombine.high %v1313, 0
        %v1315 = vcombine.low %v1186, %v1250
        %v1317 = vunpack.c.l.s4 1983009808
        %v1318 = vunpack.c.0.s8 %v1317
        %v1319 = vlaneseq
        %v1320 = vshrl.u32 %v1319, 7
        %v1321 = vsub.s32 %v1318, %v1320
        %v1322 = vrot.slane %v1315, %v1321
        %v1323 = vcombine.low %v1218, %v1282
        %v1325 = vunpack.c.l.s4 1983009808
        %v1326 = vunpack.c.0.s8 %v1325
        %v1327 = vlaneseq
        %v1328 = vshrl.u32 %v1327, 7
        %v1329 = vsub.s32 %v1326, %v1328
        %v1330 = vrot.slane %v1323, %v1329
        %v1331 = vcombine.low %v1322, %v1330
        %v1333 = vunpack.c.l.s4 1934713408
        %v1334 = vunpack.c.0.s8 %v1333
        %v1335 = vlaneseq
        %v1336 = vshrl.u32 %v1335, 7
        %v1337 = vsub.s32 %v1334, %v1336
        %v1338 = vrot.slane %v1331, %v1337
        %v1339 = vcombine.high %v1338, 0
        %v1342 = vpack.i.b16 %v1338, %v1313
        %v1344 = vshrl.u32 %v1313, 16
        %v1345 = vshrl.u32 %v1338, 16
        %v1346 = vpack.i.b16 %v1345, %v1344
        %v1350 = vpack.i.b16 %v1339, %v1314
        %v1352 = vshrl.u32 %v1314, 16
        %v1353 = vshrl.u32 %v1339, 16
        %v1354 = vpack.i.b16 %v1353, %v1352
        %1356 = vst.msk [vmem:[%s477] sm:$0xf] %vm759, %v1342
        %1357 = vst.msk [vmem:[%s477 + $0x4] sm:$0xf] %vm759, %v1346
        %1358 = vst.msk [vmem:[%s477 + $0x8] sm:$0xf] %vm759, %v1350
        %1359 = vst.msk [vmem:[%s477 + $0xc] sm:$0xf] %vm759, %v1354
        %v1360 = vld [vmem:[#allocation8] sm:$0xf]
        %v1361 = vld [vmem:[#allocation8 + $0x4] sm:$0xf]
        %v1362 = vld [vmem:[#allocation8 + $0x8] sm:$0xf]
        %v1363 = vld [vmem:[#allocation8 + $0xc] sm:$0xf]
        %v1364 = vld [vmem:[%s8] sm:$0x1]
        %v1366 = vlaneseq
        %v1367 = vshrl.u32 %v1366, 7
        %v1368 = vsub.s32 0, %v1367
        %v1369 = vrot.slane %v1364, %v1368
        %v1375 = vunpack.c.l.b16 %v1360
        %v1376 = vunpack.c.l.b16 %v1361
        %v1377 = vunpack.c.l.b16 %v1362
        %v1378 = vunpack.c.l.b16 %v1363
        %v1379 = vpack.c.b16 %v1376, %v1375
        %v1380 = vpack.c.b16 %v1378, %v1377
        %1383 = vmatprep.subr.bf16.mxu0 0
        %1384 = vmatpush1.bf16.msra.mxu0 0
        %1385 = vmatprep.subr.bf16.mxu0 0
        %1386 = vmatpush1.bf16.msra.mxu0 0
        %1387 = vmatprep.subr.bf16.mxu0 0
        %1388 = vmatpush1.bf16.msra.mxu0 0
        %1389 = vmatprep.subr.bf16.mxu0 0
        %1390 = vmatpush1.bf16.msra.mxu0 0
        %1391 = vmatprep.subr.bf16.mxu0 0
        %1392 = vmatpush1.bf16.msra.mxu0 0
        %1393 = vmatprep.subr.bf16.mxu0 0
        %1394 = vmatpush1.bf16.msra.mxu0 0
        %1395 = vmatprep.subr.bf16.mxu0 0
        %1396 = vmatpush1.bf16.msra.mxu0 %v1380
        %1397 = vmatprep.subr.bf16.mxu0 0
        %1398 = vmatpush1.bf16.msra.mxu0 %v1379
        %1399 = vmatprep.subr.bf16.mxu0 0
        %1400 = vmatpush2.bf16.msra.mxu0 0
        %1401 = vmatprep.subr.bf16.mxu0 0
        %1402 = vmatpush2.bf16.msra.mxu0 0
        %1403 = vmatprep.subr.bf16.mxu0 0
        %1404 = vmatpush2.bf16.msra.mxu0 0
        %1405 = vmatprep.subr.bf16.mxu0 0
        %1406 = vmatpush2.bf16.msra.mxu0 0
        %1407 = vmatprep.subr.bf16.mxu0 0
        %1408 = vmatpush2.bf16.msra.mxu0 0
        %1409 = vmatprep.subr.bf16.mxu0 0
        %1410 = vmatpush2.bf16.msra.mxu0 0
        %1411 = vmatprep.subr.bf16.mxu0 0
        %1412 = vmatpush2.bf16.msra.mxu0 0
        %1413 = vmatprep.subr.bf16.mxu0 0
        %1414 = vmatpush2.bf16.msra.mxu0 0
        %1415 = vmatprep.mubr.bf16.mxu0 0
        %1416 = vmatmul.mubr.bf16.gmra.mxu0 %v543
        %v1417 = vpop.f32.mrf.mxu0
        %v1418 = vadd.f32 %v1369, %v1417
        %v1419 = vpop.f32.mrf.mxu0
        %v1420 = vpop.f32.mrf.mxu0
        %v1421 = vpop.f32.mrf.mxu0
        %1422 = vdwg.mxu0
        %v1423 = vpack.c.bf16 %v1418, %v1418
        %1425 = vrot.lane.b32.xlu0 %v1423, 120
        %v1426 = vpop.permute.xlu0 %1425
        %1427 = vrot.lane.b32.xlu0 %v1423, 112
        %v1428 = vpop.permute.xlu0 %1427
        %1429 = vrot.lane.b32.xlu0 %v1423, 104
        %v1430 = vpop.permute.xlu0 %1429
        %v1432 = vunpack.c.l.s4 1983009808
        %v1433 = vunpack.c.0.s8 %v1432
        %v1434 = vlaneseq
        %v1435 = vshrl.u32 %v1434, 7
        %v1436 = vsub.s32 %v1433, %v1435
        %v1437 = vrot.slane %v1423, %v1436
        %v1440 = vunpack.c.l.s4 1983009808
        %v1441 = vunpack.c.0.s8 %v1440
        %v1442 = vlaneseq
        %v1443 = vshrl.u32 %v1442, 7
        %v1444 = vsub.s32 %v1441, %v1443
        %v1445 = vrot.slane %v1428, %v1444
        %v1446 = vcombine.low %v1437, %v1445
        %v1447 = vcombine.high %v1437, %v1445
        %v1449 = vunpack.c.l.s4 1934713408
        %v1450 = vunpack.c.0.s8 %v1449
        %v1451 = vlaneseq
        %v1452 = vshrl.u32 %v1451, 7
        %v1453 = vsub.s32 %v1450, %v1452
        %v1454 = vrot.slane %v1446, %v1453
        %v1456 = vunpack.c.l.s4 1934713408
        %v1457 = vunpack.c.0.s8 %v1456
        %v1458 = vlaneseq
        %v1459 = vshrl.u32 %v1458, 7
        %v1460 = vsub.s32 %v1457, %v1459
        %v1461 = vrot.slane %v1447, %v1460
        %v1462 = vcombine.high %v1454, 0
        %v1463 = vcombine.high %v1461, 0
        %v1466 = vunpack.c.l.s4 1983009808
        %v1467 = vunpack.c.0.s8 %v1466
        %v1468 = vlaneseq
        %v1469 = vshrl.u32 %v1468, 7
        %v1470 = vsub.s32 %v1467, %v1469
        %v1471 = vrot.slane %v1426, %v1470
        %v1474 = vunpack.c.l.s4 1983009808
        %v1475 = vunpack.c.0.s8 %v1474
        %v1476 = vlaneseq
        %v1477 = vshrl.u32 %v1476, 7
        %v1478 = vsub.s32 %v1475, %v1477
        %v1479 = vrot.slane %v1430, %v1478
        %v1480 = vcombine.low %v1471, %v1479
        %v1481 = vcombine.high %v1471, %v1479
        %v1483 = vunpack.c.l.s4 1934713408
        %v1484 = vunpack.c.0.s8 %v1483
        %v1485 = vlaneseq
        %v1486 = vshrl.u32 %v1485, 7
        %v1487 = vsub.s32 %v1484, %v1486
        %v1488 = vrot.slane %v1480, %v1487
        %v1490 = vunpack.c.l.s4 1934713408
        %v1491 = vunpack.c.0.s8 %v1490
        %v1492 = vlaneseq
        %v1493 = vshrl.u32 %v1492, 7
        %v1494 = vsub.s32 %v1491, %v1493
        %v1495 = vrot.slane %v1481, %v1494
        %v1496 = vcombine.high %v1488, 0
        %v1497 = vcombine.high %v1495, 0
        %v1500 = vpack.i.b16 %v1488, %v1454
        %v1502 = vshrl.u32 %v1454, 16
        %v1503 = vshrl.u32 %v1488, 16
        %v1504 = vpack.i.b16 %v1503, %v1502
        %v1508 = vpack.i.b16 %v1496, %v1462
        %v1510 = vshrl.u32 %v1462, 16
        %v1511 = vshrl.u32 %v1496, 16
        %v1512 = vpack.i.b16 %v1511, %v1510
        %v1516 = vpack.i.b16 %v1495, %v1461
        %v1518 = vshrl.u32 %v1461, 16
        %v1519 = vshrl.u32 %v1495, 16
        %v1520 = vpack.i.b16 %v1519, %v1518
        %v1524 = vpack.i.b16 %v1497, %v1463
        %v1526 = vshrl.u32 %v1463, 16
        %v1527 = vshrl.u32 %v1497, 16
        %v1528 = vpack.i.b16 %v1527, %v1526
        %v1530 = vcombine.low %v1500, %v1516
        %v1532 = vunpack.c.l.s4 1983009808
        %v1533 = vunpack.c.0.s8 %v1532
        %v1534 = vlaneseq
        %v1535 = vshrl.u32 %v1534, 7
        %v1536 = vsub.s32 %v1533, %v1535
        %v1537 = vrot.slane %v1530, %v1536
        %v1538 = vcombine.low %v1508, %v1524
        %v1540 = vunpack.c.l.s4 1983009808
        %v1541 = vunpack.c.0.s8 %v1540
        %v1542 = vlaneseq
        %v1543 = vshrl.u32 %v1542, 7
        %v1544 = vsub.s32 %v1541, %v1543
        %v1545 = vrot.slane %v1538, %v1544
        %v1546 = vcombine.low %v1537, %v1545
        %v1548 = vunpack.c.l.s4 1934713408
        %v1549 = vunpack.c.0.s8 %v1548
        %v1550 = vlaneseq
        %v1551 = vshrl.u32 %v1550, 7
        %v1552 = vsub.s32 %v1549, %v1551
        %v1553 = vrot.slane %v1546, %v1552
        %v1554 = vcombine.high %v1553, 0
        %v1555 = vcombine.low %v1504, %v1520
        %v1557 = vunpack.c.l.s4 1983009808
        %v1558 = vunpack.c.0.s8 %v1557
        %v1559 = vlaneseq
        %v1560 = vshrl.u32 %v1559, 7
        %v1561 = vsub.s32 %v1558, %v1560
        %v1562 = vrot.slane %v1555, %v1561
        %v1563 = vcombine.low %v1512, %v1528
        %v1565 = vunpack.c.l.s4 1983009808
        %v1566 = vunpack.c.0.s8 %v1565
        %v1567 = vlaneseq
        %v1568 = vshrl.u32 %v1567, 7
        %v1569 = vsub.s32 %v1566, %v1568
        %v1570 = vrot.slane %v1563, %v1569
        %v1571 = vcombine.low %v1562, %v1570
        %v1573 = vunpack.c.l.s4 1934713408
        %v1574 = vunpack.c.0.s8 %v1573
        %v1575 = vlaneseq
        %v1576 = vshrl.u32 %v1575, 7
        %v1577 = vsub.s32 %v1574, %v1576
        %v1578 = vrot.slane %v1571, %v1577
        %v1579 = vcombine.high %v1578, 0
        %v1582 = vpack.i.b16 %v1578, %v1553
        %v1584 = vshrl.u32 %v1553, 16
        %v1585 = vshrl.u32 %v1578, 16
        %v1586 = vpack.i.b16 %v1585, %v1584
        %v1590 = vpack.i.b16 %v1579, %v1554
        %v1592 = vshrl.u32 %v1554, 16
        %v1593 = vshrl.u32 %v1579, 16
        %v1594 = vpack.i.b16 %v1593, %v1592
        %1596 = vst.msk [vmem:[%s484] sm:$0xf] %vm759, %v1582
        %1597 = vst.msk [vmem:[%s484 + $0x4] sm:$0xf] %vm759, %v1586
        %1598 = vst.msk [vmem:[%s484 + $0x8] sm:$0xf] %vm759, %v1590
        %1599 = vst.msk [vmem:[%s484 + $0xc] sm:$0xf] %vm759, %v1594
        %s1600 = sand.u32 %s252, 1
        %s1601 = scalar_lea.sflag [#allocation4], %s1600
        %s1602 = sand.u32 %s252, 1
        %s1603 = smul.addr %s1602, 16
        %s1604 = scalar_lea.vmem [#allocation10], %s1603
        %s1605 = sand.u32 %s34, 1
        %s1606 = scalar_lea.sflag [#allocation12], %s1605
        %s1607 = sand.u32 %s280, 1
        %s1608 = smul.addr %s1607, 16
        %s1609 = scalar_lea.vmem [#allocation11], %s1608
        %s1610 = sand.u32 %s34, 1
        %s1611 = scalar_lea.sflag [#allocation12], %s1610
        %s1612 = sand.u32 %s308, 1
        %s1613 = smul.addr %s1612, 16
        %s1614 = scalar_lea.vmem [#allocation13], %s1613
        // Predicated region
        $region73: #{tpu_custom_call.1} parent=55 // pred_check
          %p1615 = pneg %p262
        $region74: #{tpu_custom_call.1} parent=55 // pred_check_branch
          %1617 = sbr.rel (%p1615) target = $region76
        $region75: #{tpu_custom_call.1} parent=55 // pred_region
          %s1619 = ssub.s32 256, 256
          %1620 = vsyncadd %s1601, %s1619
          %s1621 = smul.addr %s38, 4
          %s1622 = sadd.s32 %s39, %s1621
          %s1623 = smul.addr %s1622, 64
          %s1624 = scalar_lea.hbm %s9, %s1623
          %s1625 = sshll.u32 %s1604, 4
          %s1626 = int_to_ptr.vmem [resolvable:$true] %s1625
          %1631 = dma.vmem_to_hbm [thread:$0]  %s1626, 256, %s1624, %s1601, 64, 64, 4
        $region76: #{tpu_custom_call.1} parent=55 // pred_fallthru
          _
        // Predicated region
        $region77: #{tpu_custom_call.1} parent=55 // pred_check
          %p1632 = pneg %p290
        $region78: #{tpu_custom_call.1} parent=55 // pred_check_branch
          %1634 = sbr.rel (%p1632) target = $region80
        $region79: #{tpu_custom_call.1} parent=55 // pred_region
          %s1636 = ssub.s32 256, 256
          %1637 = vsyncadd %s1606, %s1636
          %s1638 = smul.addr %s38, 4
          %s1639 = sadd.s32 %s39, %s1638
          %s1640 = smul.addr %s1639, 64
          %s1641 = scalar_lea.hbm %s10, %s1640
          %s1642 = sshll.u32 %s1609, 4
          %s1643 = int_to_ptr.vmem [resolvable:$true] %s1642
          %1648 = dma.vmem_to_hbm [thread:$0]  %s1643, 256, %s1641, %s1606, 64, 64, 4
        $region80: #{tpu_custom_call.1} parent=55 // pred_fallthru
          _
        // Predicated region
        $region81: #{tpu_custom_call.1} parent=55 // pred_check
          %p1649 = pneg %p318
        $region82: #{tpu_custom_call.1} parent=55 // pred_check_branch
          %1651 = sbr.rel (%p1649) target = $region84
        $region83: #{tpu_custom_call.1} parent=55 // pred_region
          %s1653 = ssub.s32 256, 256
          %1654 = vsyncadd %s1611, %s1653
          %s1655 = smul.addr %s38, 4
          %s1656 = sadd.s32 %s39, %s1655
          %s1657 = smul.addr %s1656, 64
          %s1658 = scalar_lea.hbm %s11, %s1657
          %s1659 = sshll.u32 %s1614, 4
          %s1660 = int_to_ptr.vmem [resolvable:$true] %s1659
          %1665 = dma.vmem_to_hbm [thread:$0]  %s1660, 256, %s1658, %s1611, 64, 64, 4
        $region84: #{tpu_custom_call.1} parent=55 // pred_fallthru
          _
      $region56: #{tpu_custom_call.1} parent=5 // pred_fallthru
        _
      %p1666 = scmp.le.s32.totalorder 2, %s29
      // Predicated region
      $region85: #{tpu_custom_call.1} parent=5 // pred_check
        %p1667 = pneg %p1666
      $region86: #{tpu_custom_call.1} parent=5 // pred_check_branch
        %1669 = sbr.rel (%p1667) target = $region88
      $region87: #{tpu_custom_call.1} parent=5 // pred_region
        %s1670 = ssub.s32 %s29, 2
        // Predicated region
        $region89: #{tpu_custom_call.1} parent=87 // pred_check
          %p1671 = pneg %p268
        $region90: #{tpu_custom_call.1} parent=87 // pred_check_branch
          %1673 = sbr.rel (%p1671) target = $region92
        $region91: #{tpu_custom_call.1} parent=87 // pred_region
          %s1674 = sand.u32 %s253, 1
          %s1675 = scalar_lea.sflag [#allocation4], %s1674
          %s1676 = sand.u32 %s253, 1
          %s1677 = smul.addr %s1676, 16
          %s1678 = scalar_lea.vmem [#allocation10], %s1677
          %1679 = dma.done %s1675, 256
        $region92: #{tpu_custom_call.1} parent=87 // pred_fallthru
          _
        // Predicated region
        $region93: #{tpu_custom_call.1} parent=87 // pred_check
          %p1680 = pneg %p296
        $region94: #{tpu_custom_call.1} parent=87 // pred_check_branch
          %1682 = sbr.rel (%p1680) target = $region96
        $region95: #{tpu_custom_call.1} parent=87 // pred_region
          %s1683 = sand.u32 %s35, 1
          %s1684 = scalar_lea.sflag [#allocation12], %s1683
          %s1685 = sand.u32 %s281, 1
          %s1686 = smul.addr %s1685, 16
          %s1687 = scalar_lea.vmem [#allocation11], %s1686
          %1688 = dma.done %s1684, 256
        $region96: #{tpu_custom_call.1} parent=87 // pred_fallthru
          _
        // Predicated region
        $region97: #{tpu_custom_call.1} parent=87 // pred_check
          %p1689 = pneg %p324
        $region98: #{tpu_custom_call.1} parent=87 // pred_check_branch
          %1691 = sbr.rel (%p1689) target = $region100
        $region99: #{tpu_custom_call.1} parent=87 // pred_region
          %s1692 = sand.u32 %s35, 1
          %s1693 = scalar_lea.sflag [#allocation12], %s1692
          %s1694 = sand.u32 %s309, 1
          %s1695 = smul.addr %s1694, 16
          %s1696 = scalar_lea.vmem [#allocation13], %s1695
          %1697 = dma.done %s1693, 256
        $region100: #{tpu_custom_call.1} parent=87 // pred_fallthru
          _
      $region88: #{tpu_custom_call.1} parent=5 // pred_fallthru
        _
    $region6: #{tpu_custom_call.1} parent=1 // loop_footer
      %s33 = sadd.s32 1, %s29
    $region7: #{tpu_custom_call.1} parent=1 // loop_footer_branch
      %28 = sbr.rel target = $region3
    $region8: #{tpu_custom_call.1} parent=1 // loop_exit
      _
    %1698 = vsyncpa [#allocation3], 1
    %s1699 = scalar_lea.sflag [#allocation3], 1
    %1700 = vsyncpa %s1699, 1
    %1701 = vsyncpa [#allocation6], 1
    %1702 = vsyncpa [#allocation9], 1
    %1703 = vsyncpa [#allocation4], 1
    %s1704 = scalar_lea.sflag [#allocation4], 1
    %1705 = vsyncpa %s1704, 1
    %1706 = vsyncpa [#allocation12], 1
    %s1707 = scalar_lea.sflag [#allocation12], 1
    %1708 = vsyncpa %s1707, 1

</llo_original>
